<compile_context>
chip_gen: v6e
topology: v6e:2x2x1
jax: 0.10.0
libtpu: 0.0.40
codegen_flags: <defaults>
</compile_context>

<pallas_src>
import functools

import jax
import jax.numpy as jnp
from jax.experimental import pallas as pl
from jax.experimental.pallas import tpu as pltpu

KH, KW = 3, 3  # kernel size of the nn.Conv2d in the module


def _conv2d_kernel(x_ref, w_ref, b_ref, o_ref, *, n: int, cin: int, cout: int,
                   img_w: int):
    # x_ref: (N*Cin, H*W)       f32 VMEM   lane-dense flattened spatial axis
    # w_ref: (KH*KW, Cout, Cin) f32 VMEM   one (Cout, Cin) LHS per tap
    # b_ref: (Cout, 1)          f32 VMEM
    # o_ref: (N*Cout, H*W)      f32 VMEM   padded slab; wrapper slices valid part
    hw = x_ref.shape[-1]
    bias = b_ref[...]                                     # (Cout, 1)

    for bi in range(n):                                   # N=2, unrolled at trace time
        x = x_ref[pl.ds(bi * cin, cin), :]                # (Cin, HW), loaded once

        acc = None
        for t in range(KH * KW):
            kh, kw = divmod(t, KW)
            s = kh * img_w + kw                           # flattened tap offset
            # roll by (hw - s) == roll by -s: rolled[p] = x[p + s].  Wrapped
            # values only land at positions the wrapper slices away.
            xt = x if s == 0 else pltpu.roll(x, shift=hw - s, axis=1)
            w_tap = w_ref[t]                              # (Cout, Cin), free index
            d = jnp.dot(w_tap, xt, preferred_element_type=jnp.float32)
            acc = d if acc is None else acc + d           # (Cout, HW)

        o_ref[pl.ds(bi * cout, cout), :] = (acc + bias).astype(o_ref.dtype)


@jax.jit
def conv2d_pallas(x, w, b):
    n, cin, h, wi = x.shape
    cout, cin_w, kh, kw = w.shape
    assert cin_w == cin and (kh, kw) == (KH, KW)
    ho, wo = h - KH + 1, wi - KW + 1                      # stride=1, padding=0 only
    hw = h * wi

    # Layout plumbing (free reshapes / tiny transposes inside the same jit):
    x_flat = x.reshape(n * cin, hw)                       # lane-dense spatial axis
    w_taps = w.transpose(2, 3, 0, 1).reshape(KH * KW, cout, cin)
    b_col = b.reshape(cout, 1)

    out_slab = pl.pallas_call(
        functools.partial(_conv2d_kernel, n=n, cin=cin, cout=cout, img_w=wi),
        out_shape=jax.ShapeDtypeStruct((n * cout, hw), x.dtype),
        in_specs=[
            pl.BlockSpec(memory_space=pltpu.MemorySpace.VMEM),
            pl.BlockSpec(memory_space=pltpu.MemorySpace.VMEM),
            pl.BlockSpec(memory_space=pltpu.MemorySpace.VMEM),
        ],
        out_specs=pl.BlockSpec(memory_space=pltpu.MemorySpace.VMEM),
    )(x_flat, w_taps, b_col)

    # Fused (same jit): un-flatten and drop the padded (invalid) border.
    return out_slab.reshape(n, cout, h, wi)[:, :, :ho, :wo]


def conv2d_ref(x, w, b):
    # pure-JAX reference (NCHW, OIHW, VALID)
    out = jax.lax.conv_general_dilated(
        x, w, window_strides=(1, 1), padding="VALID",
        dimension_numbers=("NCHW", "OIHW", "NCHW"))
    return out + b[None, :, None, None]


if __name__ == "__main__":
    key = jax.random.PRNGKey(0)
    kx, kw_, kb = jax.random.split(key, 3)

    N, Cin, Cout, H, W = 2, 2, 2, 16, 16
    x = jax.random.normal(kx, (N, Cin, H, W), dtype=jnp.float32)
    # deterministic parameter init (synthetic; kaiming-uniform-like range)
    fan_in = Cin * KH * KW
    bound = 1.0 / (fan_in ** 0.5)
    w = jax.random.uniform(kw_, (Cout, Cin, KH, KW), jnp.float32, -bound, bound)
    b = jax.random.uniform(kb, (Cout,), jnp.float32, -bound, bound)

    out = jax.block_until_ready(conv2d_pallas(x, w, b))

    ref = conv2d_ref(x, w, b)
    assert out.shape == (N, Cout, H - 2, W - 2), out.shape
    assert jnp.allclose(out, ref, atol=1e-5, rtol=1e-5), "mismatch vs reference"
    print("KERNEL_OK")
</pallas_src>

<mosaic_0001>
module attributes {stable_mosaic.version = 11 : i64} {
  func.func @_conv2d_kernel(%arg0: memref<4x256xf32, #tpu.memory_space<vmem>>, %arg1: memref<9x2x2xf32, #tpu.memory_space<vmem>>, %arg2: memref<2x1xf32, #tpu.memory_space<vmem>>, %arg3: memref<4x256xf32, #tpu.memory_space<vmem>>) attributes {dimension_semantics = [], scalar_prefetch = 0 : i64, scratch_operands = 0 : i64, tpu.core_type = #tpu.core_type<tc>} {
    %c0 = arith.constant 0 : index
    %c0_0 = arith.constant 0 : index
    %0 = vector.load %arg2[%c0, %c0_0] : memref<2x1xf32, #tpu.memory_space<vmem>>, vector<2x1xf32>
    %c0_1 = arith.constant 0 : index
    %c0_2 = arith.constant 0 : index
    %1 = vector.load %arg0[%c0_1, %c0_2] : memref<4x256xf32, #tpu.memory_space<vmem>>, vector<2x256xf32>
    %c0_3 = arith.constant 0 : index
    %c0_4 = arith.constant 0 : index
    %c0_5 = arith.constant 0 : index
    %2 = vector.load %arg1[%c0_3, %c0_4, %c0_5] : memref<9x2x2xf32, #tpu.memory_space<vmem>>, vector<1x2x2xf32>
    %3 = vector.shape_cast %2 : vector<1x2x2xf32> to vector<2x2xf32>
    %cst = arith.constant dense<0.000000e+00> : vector<2x256xf32>
    %4 = tpu.matmul %3, %1, %cst {dimension_numbers = #tpu.dot_dimension_numbers<[1], [0], [0], [1], [0, 0, 1, 1], [], []>} : vector<2x2xf32>, vector<2x256xf32>, vector<2x256xf32> -> vector<2x256xf32>
    %c255_i32 = arith.constant 255 : i32
    %5 = tpu.dynamic_rotate %1 by %c255_i32 dim 1 : vector<2x256xf32>, i32 -> vector<2x256xf32>
    %c1 = arith.constant 1 : index
    %c0_6 = arith.constant 0 : index
    %c0_7 = arith.constant 0 : index
    %6 = vector.load %arg1[%c1, %c0_6, %c0_7] : memref<9x2x2xf32, #tpu.memory_space<vmem>>, vector<1x2x2xf32>
    %7 = vector.shape_cast %6 : vector<1x2x2xf32> to vector<2x2xf32>
    %cst_8 = arith.constant dense<0.000000e+00> : vector<2x256xf32>
    %8 = tpu.matmul %7, %5, %cst_8 {dimension_numbers = #tpu.dot_dimension_numbers<[1], [0], [0], [1], [0, 0, 1, 1], [], []>} : vector<2x2xf32>, vector<2x256xf32>, vector<2x256xf32> -> vector<2x256xf32>
    %9 = arith.addf %4, %8 : vector<2x256xf32>
    %c254_i32 = arith.constant 254 : i32
    %10 = tpu.dynamic_rotate %1 by %c254_i32 dim 1 : vector<2x256xf32>, i32 -> vector<2x256xf32>
    %c2 = arith.constant 2 : index
    %c0_9 = arith.constant 0 : index
    %c0_10 = arith.constant 0 : index
    %11 = vector.load %arg1[%c2, %c0_9, %c0_10] : memref<9x2x2xf32, #tpu.memory_space<vmem>>, vector<1x2x2xf32>
    %12 = vector.shape_cast %11 : vector<1x2x2xf32> to vector<2x2xf32>
    %cst_11 = arith.constant dense<0.000000e+00> : vector<2x256xf32>
    %13 = tpu.matmul %12, %10, %cst_11 {dimension_numbers = #tpu.dot_dimension_numbers<[1], [0], [0], [1], [0, 0, 1, 1], [], []>} : vector<2x2xf32>, vector<2x256xf32>, vector<2x256xf32> -> vector<2x256xf32>
    %14 = arith.addf %9, %13 : vector<2x256xf32>
    %c240_i32 = arith.constant 240 : i32
    %15 = tpu.dynamic_rotate %1 by %c240_i32 dim 1 : vector<2x256xf32>, i32 -> vector<2x256xf32>
    %c3 = arith.constant 3 : index
    %c0_12 = arith.constant 0 : index
    %c0_13 = arith.constant 0 : index
    %16 = vector.load %arg1[%c3, %c0_12, %c0_13] : memref<9x2x2xf32, #tpu.memory_space<vmem>>, vector<1x2x2xf32>
    %17 = vector.shape_cast %16 : vector<1x2x2xf32> to vector<2x2xf32>
    %cst_14 = arith.constant dense<0.000000e+00> : vector<2x256xf32>
    %18 = tpu.matmul %17, %15, %cst_14 {dimension_numbers = #tpu.dot_dimension_numbers<[1], [0], [0], [1], [0, 0, 1, 1], [], []>} : vector<2x2xf32>, vector<2x256xf32>, vector<2x256xf32> -> vector<2x256xf32>
    %19 = arith.addf %14, %18 : vector<2x256xf32>
    %c239_i32 = arith.constant 239 : i32
    %20 = tpu.dynamic_rotate %1 by %c239_i32 dim 1 : vector<2x256xf32>, i32 -> vector<2x256xf32>
    %c4 = arith.constant 4 : index
    %c0_15 = arith.constant 0 : index
    %c0_16 = arith.constant 0 : index
    %21 = vector.load %arg1[%c4, %c0_15, %c0_16] : memref<9x2x2xf32, #tpu.memory_space<vmem>>, vector<1x2x2xf32>
    %22 = vector.shape_cast %21 : vector<1x2x2xf32> to vector<2x2xf32>
    %cst_17 = arith.constant dense<0.000000e+00> : vector<2x256xf32>
    %23 = tpu.matmul %22, %20, %cst_17 {dimension_numbers = #tpu.dot_dimension_numbers<[1], [0], [0], [1], [0, 0, 1, 1], [], []>} : vector<2x2xf32>, vector<2x256xf32>, vector<2x256xf32> -> vector<2x256xf32>
    %24 = arith.addf %19, %23 : vector<2x256xf32>
    %c238_i32 = arith.constant 238 : i32
    %25 = tpu.dynamic_rotate %1 by %c238_i32 dim 1 : vector<2x256xf32>, i32 -> vector<2x256xf32>
    %c5 = arith.constant 5 : index
    %c0_18 = arith.constant 0 : index
    %c0_19 = arith.constant 0 : index
    %26 = vector.load %arg1[%c5, %c0_18, %c0_19] : memref<9x2x2xf32, #tpu.memory_space<vmem>>, vector<1x2x2xf32>
    %27 = vector.shape_cast %26 : vector<1x2x2xf32> to vector<2x2xf32>
    %cst_20 = arith.constant dense<0.000000e+00> : vector<2x256xf32>
    %28 = tpu.matmul %27, %25, %cst_20 {dimension_numbers = #tpu.dot_dimension_numbers<[1], [0], [0], [1], [0, 0, 1, 1], [], []>} : vector<2x2xf32>, vector<2x256xf32>, vector<2x256xf32> -> vector<2x256xf32>
    %29 = arith.addf %24, %28 : vector<2x256xf32>
    %c224_i32 = arith.constant 224 : i32
    %30 = tpu.dynamic_rotate %1 by %c224_i32 dim 1 : vector<2x256xf32>, i32 -> vector<2x256xf32>
    %c6 = arith.constant 6 : index
    %c0_21 = arith.constant 0 : index
    %c0_22 = arith.constant 0 : index
    %31 = vector.load %arg1[%c6, %c0_21, %c0_22] : memref<9x2x2xf32, #tpu.memory_space<vmem>>, vector<1x2x2xf32>
    %32 = vector.shape_cast %31 : vector<1x2x2xf32> to vector<2x2xf32>
    %cst_23 = arith.constant dense<0.000000e+00> : vector<2x256xf32>
    %33 = tpu.matmul %32, %30, %cst_23 {dimension_numbers = #tpu.dot_dimension_numbers<[1], [0], [0], [1], [0, 0, 1, 1], [], []>} : vector<2x2xf32>, vector<2x256xf32>, vector<2x256xf32> -> vector<2x256xf32>
    %34 = arith.addf %29, %33 : vector<2x256xf32>
    %c223_i32 = arith.constant 223 : i32
    %35 = tpu.dynamic_rotate %1 by %c223_i32 dim 1 : vector<2x256xf32>, i32 -> vector<2x256xf32>
    %c7 = arith.constant 7 : index
    %c0_24 = arith.constant 0 : index
    %c0_25 = arith.constant 0 : index
    %36 = vector.load %arg1[%c7, %c0_24, %c0_25] : memref<9x2x2xf32, #tpu.memory_space<vmem>>, vector<1x2x2xf32>
    %37 = vector.shape_cast %36 : vector<1x2x2xf32> to vector<2x2xf32>
    %cst_26 = arith.constant dense<0.000000e+00> : vector<2x256xf32>
    %38 = tpu.matmul %37, %35, %cst_26 {dimension_numbers = #tpu.dot_dimension_numbers<[1], [0], [0], [1], [0, 0, 1, 1], [], []>} : vector<2x2xf32>, vector<2x256xf32>, vector<2x256xf32> -> vector<2x256xf32>
    %39 = arith.addf %34, %38 : vector<2x256xf32>
    %c222_i32 = arith.constant 222 : i32
    %40 = tpu.dynamic_rotate %1 by %c222_i32 dim 1 : vector<2x256xf32>, i32 -> vector<2x256xf32>
    %c8 = arith.constant 8 : index
    %c0_27 = arith.constant 0 : index
    %c0_28 = arith.constant 0 : index
    %41 = vector.load %arg1[%c8, %c0_27, %c0_28] : memref<9x2x2xf32, #tpu.memory_space<vmem>>, vector<1x2x2xf32>
    %42 = vector.shape_cast %41 : vector<1x2x2xf32> to vector<2x2xf32>
    %cst_29 = arith.constant dense<0.000000e+00> : vector<2x256xf32>
    %43 = tpu.matmul %42, %40, %cst_29 {dimension_numbers = #tpu.dot_dimension_numbers<[1], [0], [0], [1], [0, 0, 1, 1], [], []>} : vector<2x2xf32>, vector<2x256xf32>, vector<2x256xf32> -> vector<2x256xf32>
    %44 = arith.addf %39, %43 : vector<2x256xf32>
    %45 = vector.broadcast %0 : vector<2x1xf32> to vector<2x256xf32>
    %46 = arith.addf %44, %45 : vector<2x256xf32>
    %c0_30 = arith.constant 0 : index
    %c0_31 = arith.constant 0 : index
    %47 = vector.load %arg3[%c0_30, %c0_31] : memref<4x256xf32, #tpu.memory_space<vmem>>, vector<2x256xf32>
    tpu.vector_store %arg3[%c0_30, %c0_31], %46 {strides = array<i32>} : memref<4x256xf32, #tpu.memory_space<vmem>>, vector<2x256xf32>,
    %c2_32 = arith.constant 2 : index
    %c0_33 = arith.constant 0 : index
    %48 = vector.load %arg0[%c2_32, %c0_33] : memref<4x256xf32, #tpu.memory_space<vmem>>, vector<2x256xf32>
    %c0_34 = arith.constant 0 : index
    %c0_35 = arith.constant 0 : index
    %c0_36 = arith.constant 0 : index
    %49 = vector.load %arg1[%c0_34, %c0_35, %c0_36] : memref<9x2x2xf32, #tpu.memory_space<vmem>>, vector<1x2x2xf32>
    %50 = vector.shape_cast %49 : vector<1x2x2xf32> to vector<2x2xf32>
    %cst_37 = arith.constant dense<0.000000e+00> : vector<2x256xf32>
    %51 = tpu.matmul %50, %48, %cst_37 {dimension_numbers = #tpu.dot_dimension_numbers<[1], [0], [0], [1], [0, 0, 1, 1], [], []>} : vector<2x2xf32>, vector<2x256xf32>, vector<2x256xf32> -> vector<2x256xf32>
    %c255_i32_38 = arith.constant 255 : i32
    %52 = tpu.dynamic_rotate %48 by %c255_i32_38 dim 1 : vector<2x256xf32>, i32 -> vector<2x256xf32>
    %c1_39 = arith.constant 1 : index
    %c0_40 = arith.constant 0 : index
    %c0_41 = arith.constant 0 : index
    %53 = vector.load %arg1[%c1_39, %c0_40, %c0_41] : memref<9x2x2xf32, #tpu.memory_space<vmem>>, vector<1x2x2xf32>
    %54 = vector.shape_cast %53 : vector<1x2x2xf32> to vector<2x2xf32>
    %cst_42 = arith.constant dense<0.000000e+00> : vector<2x256xf32>
    %55 = tpu.matmul %54, %52, %cst_42 {dimension_numbers = #tpu.dot_dimension_numbers<[1], [0], [0], [1], [0, 0, 1, 1], [], []>} : vector<2x2xf32>, vector<2x256xf32>, vector<2x256xf32> -> vector<2x256xf32>
    %56 = arith.addf %51, %55 : vector<2x256xf32>
    %c254_i32_43 = arith.constant 254 : i32
    %57 = tpu.dynamic_rotate %48 by %c254_i32_43 dim 1 : vector<2x256xf32>, i32 -> vector<2x256xf32>
    %c2_44 = arith.constant 2 : index
    %c0_45 = arith.constant 0 : index
    %c0_46 = arith.constant 0 : index
    %58 = vector.load %arg1[%c2_44, %c0_45, %c0_46] : memref<9x2x2xf32, #tpu.memory_space<vmem>>, vector<1x2x2xf32>
    %59 = vector.shape_cast %58 : vector<1x2x2xf32> to vector<2x2xf32>
    %cst_47 = arith.constant dense<0.000000e+00> : vector<2x256xf32>
    %60 = tpu.matmul %59, %57, %cst_47 {dimension_numbers = #tpu.dot_dimension_numbers<[1], [0], [0], [1], [0, 0, 1, 1], [], []>} : vector<2x2xf32>, vector<2x256xf32>, vector<2x256xf32> -> vector<2x256xf32>
    %61 = arith.addf %56, %60 : vector<2x256xf32>
    %c240_i32_48 = arith.constant 240 : i32
    %62 = tpu.dynamic_rotate %48 by %c240_i32_48 dim 1 : vector<2x256xf32>, i32 -> vector<2x256xf32>
    %c3_49 = arith.constant 3 : index
    %c0_50 = arith.constant 0 : index
    %c0_51 = arith.constant 0 : index
    %63 = vector.load %arg1[%c3_49, %c0_50, %c0_51] : memref<9x2x2xf32, #tpu.memory_space<vmem>>, vector<1x2x2xf32>
    %64 = vector.shape_cast %63 : vector<1x2x2xf32> to vector<2x2xf32>
    %cst_52 = arith.constant dense<0.000000e+00> : vector<2x256xf32>
    %65 = tpu.matmul %64, %62, %cst_52 {dimension_numbers = #tpu.dot_dimension_numbers<[1], [0], [0], [1], [0, 0, 1, 1], [], []>} : vector<2x2xf32>, vector<2x256xf32>, vector<2x256xf32> -> vector<2x256xf32>
    %66 = arith.addf %61, %65 : vector<2x256xf32>
    %c239_i32_53 = arith.constant 239 : i32
    %67 = tpu.dynamic_rotate %48 by %c239_i32_53 dim 1 : vector<2x256xf32>, i32 -> vector<2x256xf32>
    %c4_54 = arith.constant 4 : index
    %c0_55 = arith.constant 0 : index
    %c0_56 = arith.constant 0 : index
    %68 = vector.load %arg1[%c4_54, %c0_55, %c0_56] : memref<9x2x2xf32, #tpu.memory_space<vmem>>, vector<1x2x2xf32>
    %69 = vector.shape_cast %68 : vector<1x2x2xf32> to vector<2x2xf32>
    %cst_57 = arith.constant dense<0.000000e+00> : vector<2x256xf32>
    %70 = tpu.matmul %69, %67, %cst_57 {dimension_numbers = #tpu.dot_dimension_numbers<[1], [0], [0], [1], [0, 0, 1, 1], [], []>} : vector<2x2xf32>, vector<2x256xf32>, vector<2x256xf32> -> vector<2x256xf32>
    %71 = arith.addf %66, %70 : vector<2x256xf32>
    %c238_i32_58 = arith.constant 238 : i32
    %72 = tpu.dynamic_rotate %48 by %c238_i32_58 dim 1 : vector<2x256xf32>, i32 -> vector<2x256xf32>
    %c5_59 = arith.constant 5 : index
    %c0_60 = arith.constant 0 : index
    %c0_61 = arith.constant 0 : index
    %73 = vector.load %arg1[%c5_59, %c0_60, %c0_61] : memref<9x2x2xf32, #tpu.memory_space<vmem>>, vector<1x2x2xf32>
    %74 = vector.shape_cast %73 : vector<1x2x2xf32> to vector<2x2xf32>
    %cst_62 = arith.constant dense<0.000000e+00> : vector<2x256xf32>
    %75 = tpu.matmul %74, %72, %cst_62 {dimension_numbers = #tpu.dot_dimension_numbers<[1], [0], [0], [1], [0, 0, 1, 1], [], []>} : vector<2x2xf32>, vector<2x256xf32>, vector<2x256xf32> -> vector<2x256xf32>
    %76 = arith.addf %71, %75 : vector<2x256xf32>
    %c224_i32_63 = arith.constant 224 : i32
    %77 = tpu.dynamic_rotate %48 by %c224_i32_63 dim 1 : vector<2x256xf32>, i32 -> vector<2x256xf32>
    %c6_64 = arith.constant 6 : index
    %c0_65 = arith.constant 0 : index
    %c0_66 = arith.constant 0 : index
    %78 = vector.load %arg1[%c6_64, %c0_65, %c0_66] : memref<9x2x2xf32, #tpu.memory_space<vmem>>, vector<1x2x2xf32>
    %79 = vector.shape_cast %78 : vector<1x2x2xf32> to vector<2x2xf32>
    %cst_67 = arith.constant dense<0.000000e+00> : vector<2x256xf32>
    %80 = tpu.matmul %79, %77, %cst_67 {dimension_numbers = #tpu.dot_dimension_numbers<[1], [0], [0], [1], [0, 0, 1, 1], [], []>} : vector<2x2xf32>, vector<2x256xf32>, vector<2x256xf32> -> vector<2x256xf32>
    %81 = arith.addf %76, %80 : vector<2x256xf32>
    %c223_i32_68 = arith.constant 223 : i32
    %82 = tpu.dynamic_rotate %48 by %c223_i32_68 dim 1 : vector<2x256xf32>, i32 -> vector<2x256xf32>
    %c7_69 = arith.constant 7 : index
    %c0_70 = arith.constant 0 : index
    %c0_71 = arith.constant 0 : index
    %83 = vector.load %arg1[%c7_69, %c0_70, %c0_71] : memref<9x2x2xf32, #tpu.memory_space<vmem>>, vector<1x2x2xf32>
    %84 = vector.shape_cast %83 : vector<1x2x2xf32> to vector<2x2xf32>
    %cst_72 = arith.constant dense<0.000000e+00> : vector<2x256xf32>
    %85 = tpu.matmul %84, %82, %cst_72 {dimension_numbers = #tpu.dot_dimension_numbers<[1], [0], [0], [1], [0, 0, 1, 1], [], []>} : vector<2x2xf32>, vector<2x256xf32>, vector<2x256xf32> -> vector<2x256xf32>
    %86 = arith.addf %81, %85 : vector<2x256xf32>
    %c222_i32_73 = arith.constant 222 : i32
    %87 = tpu.dynamic_rotate %48 by %c222_i32_73 dim 1 : vector<2x256xf32>, i32 -> vector<2x256xf32>
    %c8_74 = arith.constant 8 : index
    %c0_75 = arith.constant 0 : index
    %c0_76 = arith.constant 0 : index
    %88 = vector.load %arg1[%c8_74, %c0_75, %c0_76] : memref<9x2x2xf32, #tpu.memory_space<vmem>>, vector<1x2x2xf32>
    %89 = vector.shape_cast %88 : vector<1x2x2xf32> to vector<2x2xf32>
    %cst_77 = arith.constant dense<0.000000e+00> : vector<2x256xf32>
    %90 = tpu.matmul %89, %87, %cst_77 {dimension_numbers = #tpu.dot_dimension_numbers<[1], [0], [0], [1], [0, 0, 1, 1], [], []>} : vector<2x2xf32>, vector<2x256xf32>, vector<2x256xf32> -> vector<2x256xf32>
    %91 = arith.addf %86, %90 : vector<2x256xf32>
    %92 = vector.broadcast %0 : vector<2x1xf32> to vector<2x256xf32>
    %93 = arith.addf %91, %92 : vector<2x256xf32>
    %c2_78 = arith.constant 2 : index
    %c0_79 = arith.constant 0 : index
    %94 = vector.load %arg3[%c2_78, %c0_79] : memref<4x256xf32, #tpu.memory_space<vmem>>, vector<2x256xf32>
    tpu.vector_store %arg3[%c2_78, %c0_79], %93 {strides = array<i32>} : memref<4x256xf32, #tpu.memory_space<vmem>>, vector<2x256xf32>,
    return
  }
}

</mosaic_0001>

<llo_original>
// kernel: conv2d_pallas.1
$region0: #{conv2d_pallas.1}
  #allocation0 [shape = 'u32[]', space=smem, size = 0x4, offset = 0x4, fixed_abs, tag = 'smem constant byte address 0x4 - core index']
  #allocation1 [shape = 'u32[144,128]{1,0:T(1,128)}', space=vmem, size = 0x12000, scoped, tag = 'internal scratch']
  %s0 = inlined_call_operand.vmem [shape: f32[4,256], index: 0, kind: input, shape index: {}]
  %s1 = inlined_call_operand.vmem [shape: f32[9,2,2], index: 1, kind: input, shape index: {}]
  %s2 = inlined_call_operand.vmem [shape: f32[2,1], index: 2, kind: input, shape index: {}]
  %s3 = inlined_call_operand.vmem [shape: f32[4,256], index: 3, kind: output, shape index: {}]
  %s4 = sld [smem:[#allocation0]]
  $region22: #{conv2d_pallas.1} parent=0
    _
  %s6 = ssub.s32 1, %s4
  %s7 = scalar_select 0, %s6, %s4
  // Predicated region
  $region2: #{conv2d_pallas.1} parent=0 // pred_check
    _
  $region3: #{conv2d_pallas.1} parent=0 // pred_check_branch
    %9 = sbr.rel (0) target = $region5
  $region4: #{conv2d_pallas.1} parent=0 // pred_region
    _
  $region5: #{conv2d_pallas.1} parent=0 // pred_fallthru
    _
  // Predicated region
  $region6: #{conv2d_pallas.1} parent=0 // pred_check
    _
  $region7: #{conv2d_pallas.1} parent=0 // pred_check_branch
    %11 = sbr.rel (0) target = $region9
  $region8: #{conv2d_pallas.1} parent=0 // pred_region
    _
  $region9: #{conv2d_pallas.1} parent=0 // pred_fallthru
    _
  // Predicated region
  $region10: #{conv2d_pallas.1} parent=0 // pred_check
    _
  $region11: #{conv2d_pallas.1} parent=0 // pred_check_branch
    %13 = sbr.rel (0) target = $region13
  $region12: #{conv2d_pallas.1} parent=0 // pred_region
    _
  $region13: #{conv2d_pallas.1} parent=0 // pred_fallthru
    _
  %v14 = vld [vmem:[%s2] sm:$0x3]
  %v15 = vld [vmem:[%s0] sm:$0x33]
  %v16 = vld [vmem:[%s1] sm:$0x3]
  %v18 = vcombine.high %v15, %v15
  %20 = vrot.lane.b32.xlu0 %v15, 127
  %v21 = vpop.permute.xlu0 %20
  %22 = vrot.lane.b32.xlu0 %v18, 127
  %v23 = vpop.permute.xlu0 %22
  %v24 = vlaneseq
  %v25 = vand.u32 %v24, 127
  %vm26 = vcmp.lt.s32.totalorder %v25, 127
  %v27 = vsel %vm26, %v21, %v23
  %v28 = vsel %vm26, %v23, %v21
  %s29 = scalar_lea.vmem %s1, 2
  %v30 = vld [vmem:[%s29] sm:$0x3]
  %vm31 = vcmask 15360
  %v33 = vsel %vm31, %v30, 0
  %vm35 = vcmask 1041408
  %v37 = vsel %vm35, %v27, 0
  %v40 = vsel %vm35, %v28, 0
  %42 = vmatprep.subr.mxu0 0.0
  %43 = vmatpush1.msra.mxu0 0.0
  %44 = vmatprep.subr.mxu0 0.0
  %45 = vmatpush1.msra.mxu0 0.0
  %46 = vmatprep.subr.mxu0 0.0
  %47 = vmatpush1.msra.mxu0 0.0
  %48 = vmatprep.subr.mxu0 0.0
  %49 = vmatpush1.msra.mxu0 0.0
  %50 = vmatprep.subr.mxu0 0.0
  %51 = vmatpush1.msra.mxu0 0.0
  %52 = vmatprep.subr.mxu0 0.0
  %53 = vmatpush1.msra.mxu0 0.0
  %54 = vmatprep.subr.mxu0 0.0
  %55 = vmatpush1.msra.mxu0 0.0
  %56 = vmatprep.subr.mxu0 0.0
  %57 = vmatpush1.msra.mxu0 0.0
  %58 = vmatprep.subr.mxu0 0.0
  %59 = vmatpush1.msra.mxu0 0.0
  %60 = vmatprep.subr.mxu0 0.0
  %61 = vmatpush1.msra.mxu0 0.0
  %62 = vmatprep.subr.mxu0 0.0
  %63 = vmatpush1.msra.mxu0 0.0
  %64 = vmatprep.subr.mxu0 0.0
  %65 = vmatpush1.msra.mxu0 0.0
  %66 = vmatprep.subr.mxu0 0.0
  %67 = vmatpush1.msra.mxu0 0.0
  %68 = vmatprep.subr.mxu0 0.0
  %69 = vmatpush1.msra.mxu0 0.0
  %70 = vmatprep.subr.mxu0 0.0
  %71 = vmatpush1.msra.mxu0 0.0
  %72 = vmatprep.subr.mxu0 %v40
  %73 = vmatpush1.msra.mxu0 %v37
  %74 = vmatprep.subr.mxu0 0.0
  %75 = vmatpush2.msra.mxu0 0.0
  %76 = vmatprep.subr.mxu0 0.0
  %77 = vmatpush2.msra.mxu0 0.0
  %78 = vmatprep.subr.mxu0 0.0
  %79 = vmatpush2.msra.mxu0 0.0
  %80 = vmatprep.subr.mxu0 0.0
  %81 = vmatpush2.msra.mxu0 0.0
  %82 = vmatprep.subr.mxu0 0.0
  %83 = vmatpush2.msra.mxu0 0.0
  %84 = vmatprep.subr.mxu0 0.0
  %85 = vmatpush2.msra.mxu0 0.0
  %86 = vmatprep.subr.mxu0 0.0
  %87 = vmatpush2.msra.mxu0 0.0
  %88 = vmatprep.subr.mxu0 0.0
  %89 = vmatpush2.msra.mxu0 0.0
  %90 = vmatprep.subr.mxu0 0.0
  %91 = vmatpush2.msra.mxu0 0.0
  %92 = vmatprep.subr.mxu0 0.0
  %93 = vmatpush2.msra.mxu0 0.0
  %94 = vmatprep.subr.mxu0 0.0
  %95 = vmatpush2.msra.mxu0 0.0
  %96 = vmatprep.subr.mxu0 0.0
  %97 = vmatpush2.msra.mxu0 0.0
  %98 = vmatprep.subr.mxu0 0.0
  %99 = vmatpush2.msra.mxu0 0.0
  %100 = vmatprep.subr.mxu0 0.0
  %101 = vmatpush2.msra.mxu0 0.0
  %102 = vmatprep.subr.mxu0 0.0
  %103 = vmatpush2.msra.mxu0 0.0
  %104 = vmatprep.subr.mxu0 0.0
  %105 = vmatpush2.msra.mxu0 0.0
  %106 = vmatprep.mubr.f32.mxu0 0.0
  %107 = vmatmul.mubr.f32.gmra.mxu0 %v33
  %v108 = vpop.f32.mrf.mxu0
  %v109 = vadd.f32 0.0, %v108
  %v110 = vpop.f32.mrf.mxu0
  %v111 = vadd.f32 0.0, %v110
  %112 = vdwg.mxu0
  %v114 = vsel %vm31, %v16, 0
  %v116 = vsel %vm35, %v15, 0
  %v118 = vsel %vm35, %v18, 0
  %120 = vmatprep.subr.mxu0 0.0
  %121 = vmatpush1.msra.mxu0 0.0
  %122 = vmatprep.subr.mxu0 0.0
  %123 = vmatpush1.msra.mxu0 0.0
  %124 = vmatprep.subr.mxu0 0.0
  %125 = vmatpush1.msra.mxu0 0.0
  %126 = vmatprep.subr.mxu0 0.0
  %127 = vmatpush1.msra.mxu0 0.0
  %128 = vmatprep.subr.mxu0 0.0
  %129 = vmatpush1.msra.mxu0 0.0
  %130 = vmatprep.subr.mxu0 0.0
  %131 = vmatpush1.msra.mxu0 0.0
  %132 = vmatprep.subr.mxu0 0.0
  %133 = vmatpush1.msra.mxu0 0.0
  %134 = vmatprep.subr.mxu0 0.0
  %135 = vmatpush1.msra.mxu0 0.0
  %136 = vmatprep.subr.mxu0 0.0
  %137 = vmatpush1.msra.mxu0 0.0
  %138 = vmatprep.subr.mxu0 0.0
  %139 = vmatpush1.msra.mxu0 0.0
  %140 = vmatprep.subr.mxu0 0.0
  %141 = vmatpush1.msra.mxu0 0.0
  %142 = vmatprep.subr.mxu0 0.0
  %143 = vmatpush1.msra.mxu0 0.0
  %144 = vmatprep.subr.mxu0 0.0
  %145 = vmatpush1.msra.mxu0 0.0
  %146 = vmatprep.subr.mxu0 0.0
  %147 = vmatpush1.msra.mxu0 0.0
  %148 = vmatprep.subr.mxu0 0.0
  %149 = vmatpush1.msra.mxu0 0.0
  %150 = vmatprep.subr.mxu0 %v118
  %151 = vmatpush1.msra.mxu0 %v116
  %152 = vmatprep.subr.mxu0 0.0
  %153 = vmatpush2.msra.mxu0 0.0
  %154 = vmatprep.subr.mxu0 0.0
  %155 = vmatpush2.msra.mxu0 0.0
  %156 = vmatprep.subr.mxu0 0.0
  %157 = vmatpush2.msra.mxu0 0.0
  %158 = vmatprep.subr.mxu0 0.0
  %159 = vmatpush2.msra.mxu0 0.0
  %160 = vmatprep.subr.mxu0 0.0
  %161 = vmatpush2.msra.mxu0 0.0
  %162 = vmatprep.subr.mxu0 0.0
  %163 = vmatpush2.msra.mxu0 0.0
  %164 = vmatprep.subr.mxu0 0.0
  %165 = vmatpush2.msra.mxu0 0.0
  %166 = vmatprep.subr.mxu0 0.0
  %167 = vmatpush2.msra.mxu0 0.0
  %168 = vmatprep.subr.mxu0 0.0
  %169 = vmatpush2.msra.mxu0 0.0
  %170 = vmatprep.subr.mxu0 0.0
  %171 = vmatpush2.msra.mxu0 0.0
  %172 = vmatprep.subr.mxu0 0.0
  %173 = vmatpush2.msra.mxu0 0.0
  %174 = vmatprep.subr.mxu0 0.0
  %175 = vmatpush2.msra.mxu0 0.0
  %176 = vmatprep.subr.mxu0 0.0
  %177 = vmatpush2.msra.mxu0 0.0
  %178 = vmatprep.subr.mxu0 0.0
  %179 = vmatpush2.msra.mxu0 0.0
  %180 = vmatprep.subr.mxu0 0.0
  %181 = vmatpush2.msra.mxu0 0.0
  %182 = vmatprep.subr.mxu0 0.0
  %183 = vmatpush2.msra.mxu0 0.0
  %184 = vmatprep.mubr.f32.mxu0 0.0
  %185 = vmatmul.mubr.f32.gmra.mxu0 %v114
  %v186 = vpop.f32.mrf.mxu0
  %v187 = vadd.f32 %v109, %v186
  %v188 = vpop.f32.mrf.mxu0
  %v189 = vadd.f32 %v111, %v188
  %190 = vdwg.mxu0
  %191 = vrot.lane.b32.xlu0 %v15, 126
  %v192 = vpop.permute.xlu0 %191
  %193 = vrot.lane.b32.xlu0 %v18, 126
  %v194 = vpop.permute.xlu0 %193
  %vm195 = vcmp.lt.s32.totalorder %v25, 126
  %v196 = vsel %vm195, %v192, %v194
  %v197 = vsel %vm195, %v194, %v192
  %s198 = scalar_lea.vmem %s1, 4
  %v199 = vld [vmem:[%s198] sm:$0x3]
  %v201 = vsel %vm31, %v199, 0
  %v204 = vsel %vm35, %v196, 0
  %v207 = vsel %vm35, %v197, 0
  %209 = vmatprep.subr.mxu0 0.0
  %210 = vmatpush1.msra.mxu0 0.0
  %211 = vmatprep.subr.mxu0 0.0
  %212 = vmatpush1.msra.mxu0 0.0
  %213 = vmatprep.subr.mxu0 0.0
  %214 = vmatpush1.msra.mxu0 0.0
  %215 = vmatprep.subr.mxu0 0.0
  %216 = vmatpush1.msra.mxu0 0.0
  %217 = vmatprep.subr.mxu0 0.0
  %218 = vmatpush1.msra.mxu0 0.0
  %219 = vmatprep.subr.mxu0 0.0
  %220 = vmatpush1.msra.mxu0 0.0
  %221 = vmatprep.subr.mxu0 0.0
  %222 = vmatpush1.msra.mxu0 0.0
  %223 = vmatprep.subr.mxu0 0.0
  %224 = vmatpush1.msra.mxu0 0.0
  %225 = vmatprep.subr.mxu0 0.0
  %226 = vmatpush1.msra.mxu0 0.0
  %227 = vmatprep.subr.mxu0 0.0
  %228 = vmatpush1.msra.mxu0 0.0
  %229 = vmatprep.subr.mxu0 0.0
  %230 = vmatpush1.msra.mxu0 0.0
  %231 = vmatprep.subr.mxu0 0.0
  %232 = vmatpush1.msra.mxu0 0.0
  %233 = vmatprep.subr.mxu0 0.0
  %234 = vmatpush1.msra.mxu0 0.0
  %235 = vmatprep.subr.mxu0 0.0
  %236 = vmatpush1.msra.mxu0 0.0
  %237 = vmatprep.subr.mxu0 0.0
  %238 = vmatpush1.msra.mxu0 0.0
  %239 = vmatprep.subr.mxu0 %v207
  %240 = vmatpush1.msra.mxu0 %v204
  %241 = vmatprep.subr.mxu0 0.0
  %242 = vmatpush2.msra.mxu0 0.0
  %243 = vmatprep.subr.mxu0 0.0
  %244 = vmatpush2.msra.mxu0 0.0
  %245 = vmatprep.subr.mxu0 0.0
  %246 = vmatpush2.msra.mxu0 0.0
  %247 = vmatprep.subr.mxu0 0.0
  %248 = vmatpush2.msra.mxu0 0.0
  %249 = vmatprep.subr.mxu0 0.0
  %250 = vmatpush2.msra.mxu0 0.0
  %251 = vmatprep.subr.mxu0 0.0
  %252 = vmatpush2.msra.mxu0 0.0
  %253 = vmatprep.subr.mxu0 0.0
  %254 = vmatpush2.msra.mxu0 0.0
  %255 = vmatprep.subr.mxu0 0.0
  %256 = vmatpush2.msra.mxu0 0.0
  %257 = vmatprep.subr.mxu0 0.0
  %258 = vmatpush2.msra.mxu0 0.0
  %259 = vmatprep.subr.mxu0 0.0
  %260 = vmatpush2.msra.mxu0 0.0
  %261 = vmatprep.subr.mxu0 0.0
  %262 = vmatpush2.msra.mxu0 0.0
  %263 = vmatprep.subr.mxu0 0.0
  %264 = vmatpush2.msra.mxu0 0.0
  %265 = vmatprep.subr.mxu0 0.0
  %266 = vmatpush2.msra.mxu0 0.0
  %267 = vmatprep.subr.mxu0 0.0
  %268 = vmatpush2.msra.mxu0 0.0
  %269 = vmatprep.subr.mxu0 0.0
  %270 = vmatpush2.msra.mxu0 0.0
  %271 = vmatprep.subr.mxu0 0.0
  %272 = vmatpush2.msra.mxu0 0.0
  %273 = vmatprep.mubr.f32.mxu0 0.0
  %274 = vmatmul.mubr.f32.gmra.mxu0 %v201
  %v275 = vpop.f32.mrf.mxu0
  %v276 = vadd.f32 0.0, %v275
  %v277 = vpop.f32.mrf.mxu0
  %v278 = vadd.f32 0.0, %v277
  %279 = vdwg.mxu0
  %v280 = vadd.f32 %v187, %v276
  %v281 = vadd.f32 %v189, %v278
  %282 = vrot.lane.b32.xlu0 %v15, 112
  %v283 = vpop.permute.xlu0 %282
  %284 = vrot.lane.b32.xlu0 %v18, 112
  %v285 = vpop.permute.xlu0 %284
  %vm286 = vcmp.lt.s32.totalorder %v25, 112
  %v287 = vsel %vm286, %v283, %v285
  %v288 = vsel %vm286, %v285, %v283
  %s289 = scalar_lea.vmem %s1, 6
  %v290 = vld [vmem:[%s289] sm:$0x3]
  %v292 = vsel %vm31, %v290, 0
  %v295 = vsel %vm35, %v287, 0
  %v298 = vsel %vm35, %v288, 0
  %300 = vmatprep.subr.mxu0 0.0
  %301 = vmatpush1.msra.mxu0 0.0
  %302 = vmatprep.subr.mxu0 0.0
  %303 = vmatpush1.msra.mxu0 0.0
  %304 = vmatprep.subr.mxu0 0.0
  %305 = vmatpush1.msra.mxu0 0.0
  %306 = vmatprep.subr.mxu0 0.0
  %307 = vmatpush1.msra.mxu0 0.0
  %308 = vmatprep.subr.mxu0 0.0
  %309 = vmatpush1.msra.mxu0 0.0
  %310 = vmatprep.subr.mxu0 0.0
  %311 = vmatpush1.msra.mxu0 0.0
  %312 = vmatprep.subr.mxu0 0.0
  %313 = vmatpush1.msra.mxu0 0.0
  %314 = vmatprep.subr.mxu0 0.0
  %315 = vmatpush1.msra.mxu0 0.0
  %316 = vmatprep.subr.mxu0 0.0
  %317 = vmatpush1.msra.mxu0 0.0
  %318 = vmatprep.subr.mxu0 0.0
  %319 = vmatpush1.msra.mxu0 0.0
  %320 = vmatprep.subr.mxu0 0.0
  %321 = vmatpush1.msra.mxu0 0.0
  %322 = vmatprep.subr.mxu0 0.0
  %323 = vmatpush1.msra.mxu0 0.0
  %324 = vmatprep.subr.mxu0 0.0
  %325 = vmatpush1.msra.mxu0 0.0
  %326 = vmatprep.subr.mxu0 0.0
  %327 = vmatpush1.msra.mxu0 0.0
  %328 = vmatprep.subr.mxu0 0.0
  %329 = vmatpush1.msra.mxu0 0.0
  %330 = vmatprep.subr.mxu0 %v298
  %331 = vmatpush1.msra.mxu0 %v295
  %332 = vmatprep.subr.mxu0 0.0
  %333 = vmatpush2.msra.mxu0 0.0
  %334 = vmatprep.subr.mxu0 0.0
  %335 = vmatpush2.msra.mxu0 0.0
  %336 = vmatprep.subr.mxu0 0.0
  %337 = vmatpush2.msra.mxu0 0.0
  %338 = vmatprep.subr.mxu0 0.0
  %339 = vmatpush2.msra.mxu0 0.0
  %340 = vmatprep.subr.mxu0 0.0
  %341 = vmatpush2.msra.mxu0 0.0
  %342 = vmatprep.subr.mxu0 0.0
  %343 = vmatpush2.msra.mxu0 0.0
  %344 = vmatprep.subr.mxu0 0.0
  %345 = vmatpush2.msra.mxu0 0.0
  %346 = vmatprep.subr.mxu0 0.0
  %347 = vmatpush2.msra.mxu0 0.0
  %348 = vmatprep.subr.mxu0 0.0
  %349 = vmatpush2.msra.mxu0 0.0
  %350 = vmatprep.subr.mxu0 0.0
  %351 = vmatpush2.msra.mxu0 0.0
  %352 = vmatprep.subr.mxu0 0.0
  %353 = vmatpush2.msra.mxu0 0.0
  %354 = vmatprep.subr.mxu0 0.0
  %355 = vmatpush2.msra.mxu0 0.0
  %356 = vmatprep.subr.mxu0 0.0
  %357 = vmatpush2.msra.mxu0 0.0
  %358 = vmatprep.subr.mxu0 0.0
  %359 = vmatpush2.msra.mxu0 0.0
  %360 = vmatprep.subr.mxu0 0.0
  %361 = vmatpush2.msra.mxu0 0.0
  %362 = vmatprep.subr.mxu0 0.0
  %363 = vmatpush2.msra.mxu0 0.0
  %364 = vmatprep.mubr.f32.mxu0 0.0
  %365 = vmatmul.mubr.f32.gmra.mxu0 %v292
  %v366 = vpop.f32.mrf.mxu0
  %v367 = vadd.f32 0.0, %v366
  %v368 = vpop.f32.mrf.mxu0
  %v369 = vadd.f32 0.0, %v368
  %370 = vdwg.mxu0
  %v371 = vadd.f32 %v280, %v367
  %v372 = vadd.f32 %v281, %v369
  %373 = vrot.lane.b32.xlu0 %v15, 111
  %v374 = vpop.permute.xlu0 %373
  %375 = vrot.lane.b32.xlu0 %v18, 111
  %v376 = vpop.permute.xlu0 %375
  %vm377 = vcmp.lt.s32.totalorder %v25, 111
  %v378 = vsel %vm377, %v374, %v376
  %v379 = vsel %vm377, %v376, %v374
  %s380 = scalar_lea.vmem %s1, 8
  %v381 = vld [vmem:[%s380] sm:$0x3]
  %v383 = vsel %vm31, %v381, 0
  %v386 = vsel %vm35, %v378, 0
  %v389 = vsel %vm35, %v379, 0
  %391 = vmatprep.subr.mxu0 0.0
  %392 = vmatpush1.msra.mxu0 0.0
  %393 = vmatprep.subr.mxu0 0.0
  %394 = vmatpush1.msra.mxu0 0.0
  %395 = vmatprep.subr.mxu0 0.0
  %396 = vmatpush1.msra.mxu0 0.0
  %397 = vmatprep.subr.mxu0 0.0
  %398 = vmatpush1.msra.mxu0 0.0
  %399 = vmatprep.subr.mxu0 0.0
  %400 = vmatpush1.msra.mxu0 0.0
  %401 = vmatprep.subr.mxu0 0.0
  %402 = vmatpush1.msra.mxu0 0.0
  %403 = vmatprep.subr.mxu0 0.0
  %404 = vmatpush1.msra.mxu0 0.0
  %405 = vmatprep.subr.mxu0 0.0
  %406 = vmatpush1.msra.mxu0 0.0
  %407 = vmatprep.subr.mxu0 0.0
  %408 = vmatpush1.msra.mxu0 0.0
  %409 = vmatprep.subr.mxu0 0.0
  %410 = vmatpush1.msra.mxu0 0.0
  %411 = vmatprep.subr.mxu0 0.0
  %412 = vmatpush1.msra.mxu0 0.0
  %413 = vmatprep.subr.mxu0 0.0
  %414 = vmatpush1.msra.mxu0 0.0
  %415 = vmatprep.subr.mxu0 0.0
  %416 = vmatpush1.msra.mxu0 0.0
  %417 = vmatprep.subr.mxu0 0.0
  %418 = vmatpush1.msra.mxu0 0.0
  %419 = vmatprep.subr.mxu0 0.0
  %420 = vmatpush1.msra.mxu0 0.0
  %421 = vmatprep.subr.mxu0 %v389
  %422 = vmatpush1.msra.mxu0 %v386
  %423 = vmatprep.subr.mxu0 0.0
  %424 = vmatpush2.msra.mxu0 0.0
  %425 = vmatprep.subr.mxu0 0.0
  %426 = vmatpush2.msra.mxu0 0.0
  %427 = vmatprep.subr.mxu0 0.0
  %428 = vmatpush2.msra.mxu0 0.0
  %429 = vmatprep.subr.mxu0 0.0
  %430 = vmatpush2.msra.mxu0 0.0
  %431 = vmatprep.subr.mxu0 0.0
  %432 = vmatpush2.msra.mxu0 0.0
  %433 = vmatprep.subr.mxu0 0.0
  %434 = vmatpush2.msra.mxu0 0.0
  %435 = vmatprep.subr.mxu0 0.0
  %436 = vmatpush2.msra.mxu0 0.0
  %437 = vmatprep.subr.mxu0 0.0
  %438 = vmatpush2.msra.mxu0 0.0
  %439 = vmatprep.subr.mxu0 0.0
  %440 = vmatpush2.msra.mxu0 0.0
  %441 = vmatprep.subr.mxu0 0.0
  %442 = vmatpush2.msra.mxu0 0.0
  %443 = vmatprep.subr.mxu0 0.0
  %444 = vmatpush2.msra.mxu0 0.0
  %445 = vmatprep.subr.mxu0 0.0
  %446 = vmatpush2.msra.mxu0 0.0
  %447 = vmatprep.subr.mxu0 0.0
  %448 = vmatpush2.msra.mxu0 0.0
  %449 = vmatprep.subr.mxu0 0.0
  %450 = vmatpush2.msra.mxu0 0.0
  %451 = vmatprep.subr.mxu0 0.0
  %452 = vmatpush2.msra.mxu0 0.0
  %453 = vmatprep.subr.mxu0 0.0
  %454 = vmatpush2.msra.mxu0 0.0
  %455 = vmatprep.mubr.f32.mxu0 0.0
  %456 = vmatmul.mubr.f32.gmra.mxu0 %v383
  %v457 = vpop.f32.mrf.mxu0
  %v458 = vadd.f32 0.0, %v457
  %v459 = vpop.f32.mrf.mxu0
  %v460 = vadd.f32 0.0, %v459
  %461 = vdwg.mxu0
  %v462 = vadd.f32 %v371, %v458
  %v463 = vadd.f32 %v372, %v460
  %464 = vrot.lane.b32.xlu0 %v15, 110
  %v465 = vpop.permute.xlu0 %464
  %466 = vrot.lane.b32.xlu0 %v18, 110
  %v467 = vpop.permute.xlu0 %466
  %vm468 = vcmp.lt.s32.totalorder %v25, 110
  %v469 = vsel %vm468, %v465, %v467
  %v470 = vsel %vm468, %v467, %v465
  %s471 = scalar_lea.vmem %s1, 10
  %v472 = vld [vmem:[%s471] sm:$0x3]
  %v474 = vsel %vm31, %v472, 0
  %v477 = vsel %vm35, %v469, 0
  %v480 = vsel %vm35, %v470, 0
  %482 = vmatprep.subr.mxu0 0.0
  %483 = vmatpush1.msra.mxu0 0.0
  %484 = vmatprep.subr.mxu0 0.0
  %485 = vmatpush1.msra.mxu0 0.0
  %486 = vmatprep.subr.mxu0 0.0
  %487 = vmatpush1.msra.mxu0 0.0
  %488 = vmatprep.subr.mxu0 0.0
  %489 = vmatpush1.msra.mxu0 0.0
  %490 = vmatprep.subr.mxu0 0.0
  %491 = vmatpush1.msra.mxu0 0.0
  %492 = vmatprep.subr.mxu0 0.0
  %493 = vmatpush1.msra.mxu0 0.0
  %494 = vmatprep.subr.mxu0 0.0
  %495 = vmatpush1.msra.mxu0 0.0
  %496 = vmatprep.subr.mxu0 0.0
  %497 = vmatpush1.msra.mxu0 0.0
  %498 = vmatprep.subr.mxu0 0.0
  %499 = vmatpush1.msra.mxu0 0.0
  %500 = vmatprep.subr.mxu0 0.0
  %501 = vmatpush1.msra.mxu0 0.0
  %502 = vmatprep.subr.mxu0 0.0
  %503 = vmatpush1.msra.mxu0 0.0
  %504 = vmatprep.subr.mxu0 0.0
  %505 = vmatpush1.msra.mxu0 0.0
  %506 = vmatprep.subr.mxu0 0.0
  %507 = vmatpush1.msra.mxu0 0.0
  %508 = vmatprep.subr.mxu0 0.0
  %509 = vmatpush1.msra.mxu0 0.0
  %510 = vmatprep.subr.mxu0 0.0
  %511 = vmatpush1.msra.mxu0 0.0
  %512 = vmatprep.subr.mxu0 %v480
  %513 = vmatpush1.msra.mxu0 %v477
  %514 = vmatprep.subr.mxu0 0.0
  %515 = vmatpush2.msra.mxu0 0.0
  %516 = vmatprep.subr.mxu0 0.0
  %517 = vmatpush2.msra.mxu0 0.0
  %518 = vmatprep.subr.mxu0 0.0
  %519 = vmatpush2.msra.mxu0 0.0
  %520 = vmatprep.subr.mxu0 0.0
  %521 = vmatpush2.msra.mxu0 0.0
  %522 = vmatprep.subr.mxu0 0.0
  %523 = vmatpush2.msra.mxu0 0.0
  %524 = vmatprep.subr.mxu0 0.0
  %525 = vmatpush2.msra.mxu0 0.0
  %526 = vmatprep.subr.mxu0 0.0
  %527 = vmatpush2.msra.mxu0 0.0
  %528 = vmatprep.subr.mxu0 0.0
  %529 = vmatpush2.msra.mxu0 0.0
  %530 = vmatprep.subr.mxu0 0.0
  %531 = vmatpush2.msra.mxu0 0.0
  %532 = vmatprep.subr.mxu0 0.0
  %533 = vmatpush2.msra.mxu0 0.0
  %534 = vmatprep.subr.mxu0 0.0
  %535 = vmatpush2.msra.mxu0 0.0
  %536 = vmatprep.subr.mxu0 0.0
  %537 = vmatpush2.msra.mxu0 0.0
  %538 = vmatprep.subr.mxu0 0.0
  %539 = vmatpush2.msra.mxu0 0.0
  %540 = vmatprep.subr.mxu0 0.0
  %541 = vmatpush2.msra.mxu0 0.0
  %542 = vmatprep.subr.mxu0 0.0
  %543 = vmatpush2.msra.mxu0 0.0
  %544 = vmatprep.subr.mxu0 0.0
  %545 = vmatpush2.msra.mxu0 0.0
  %546 = vmatprep.mubr.f32.mxu0 0.0
  %547 = vmatmul.mubr.f32.gmra.mxu0 %v474
  %v548 = vpop.f32.mrf.mxu0
  %v549 = vadd.f32 0.0, %v548
  %v550 = vpop.f32.mrf.mxu0
  %v551 = vadd.f32 0.0, %v550
  %552 = vdwg.mxu0
  %v553 = vadd.f32 %v462, %v549
  %v554 = vadd.f32 %v463, %v551
  %555 = vrot.lane.b32.xlu0 %v15, 96
  %v556 = vpop.permute.xlu0 %555
  %557 = vrot.lane.b32.xlu0 %v18, 96
  %v558 = vpop.permute.xlu0 %557
  %vm559 = vcmp.lt.s32.totalorder %v25, 96
  %v560 = vsel %vm559, %v556, %v558
  %v561 = vsel %vm559, %v558, %v556
  %s562 = scalar_lea.vmem %s1, 12
  %v563 = vld [vmem:[%s562] sm:$0x3]
  %v565 = vsel %vm31, %v563, 0
  %v568 = vsel %vm35, %v560, 0
  %v571 = vsel %vm35, %v561, 0
  %573 = vmatprep.subr.mxu0 0.0
  %574 = vmatpush1.msra.mxu0 0.0
  %575 = vmatprep.subr.mxu0 0.0
  %576 = vmatpush1.msra.mxu0 0.0
  %577 = vmatprep.subr.mxu0 0.0
  %578 = vmatpush1.msra.mxu0 0.0
  %579 = vmatprep.subr.mxu0 0.0
  %580 = vmatpush1.msra.mxu0 0.0
  %581 = vmatprep.subr.mxu0 0.0
  %582 = vmatpush1.msra.mxu0 0.0
  %583 = vmatprep.subr.mxu0 0.0
  %584 = vmatpush1.msra.mxu0 0.0
  %585 = vmatprep.subr.mxu0 0.0
  %586 = vmatpush1.msra.mxu0 0.0
  %587 = vmatprep.subr.mxu0 0.0
  %588 = vmatpush1.msra.mxu0 0.0
  %589 = vmatprep.subr.mxu0 0.0
  %590 = vmatpush1.msra.mxu0 0.0
  %591 = vmatprep.subr.mxu0 0.0
  %592 = vmatpush1.msra.mxu0 0.0
  %593 = vmatprep.subr.mxu0 0.0
  %594 = vmatpush1.msra.mxu0 0.0
  %595 = vmatprep.subr.mxu0 0.0
  %596 = vmatpush1.msra.mxu0 0.0
  %597 = vmatprep.subr.mxu0 0.0
  %598 = vmatpush1.msra.mxu0 0.0
  %599 = vmatprep.subr.mxu0 0.0
  %600 = vmatpush1.msra.mxu0 0.0
  %601 = vmatprep.subr.mxu0 0.0
  %602 = vmatpush1.msra.mxu0 0.0
  %603 = vmatprep.subr.mxu0 %v571
  %604 = vmatpush1.msra.mxu0 %v568
  %605 = vmatprep.subr.mxu0 0.0
  %606 = vmatpush2.msra.mxu0 0.0
  %607 = vmatprep.subr.mxu0 0.0
  %608 = vmatpush2.msra.mxu0 0.0
  %609 = vmatprep.subr.mxu0 0.0
  %610 = vmatpush2.msra.mxu0 0.0
  %611 = vmatprep.subr.mxu0 0.0
  %612 = vmatpush2.msra.mxu0 0.0
  %613 = vmatprep.subr.mxu0 0.0
  %614 = vmatpush2.msra.mxu0 0.0
  %615 = vmatprep.subr.mxu0 0.0
  %616 = vmatpush2.msra.mxu0 0.0
  %617 = vmatprep.subr.mxu0 0.0
  %618 = vmatpush2.msra.mxu0 0.0
  %619 = vmatprep.subr.mxu0 0.0
  %620 = vmatpush2.msra.mxu0 0.0
  %621 = vmatprep.subr.mxu0 0.0
  %622 = vmatpush2.msra.mxu0 0.0
  %623 = vmatprep.subr.mxu0 0.0
  %624 = vmatpush2.msra.mxu0 0.0
  %625 = vmatprep.subr.mxu0 0.0
  %626 = vmatpush2.msra.mxu0 0.0
  %627 = vmatprep.subr.mxu0 0.0
  %628 = vmatpush2.msra.mxu0 0.0
  %629 = vmatprep.subr.mxu0 0.0
  %630 = vmatpush2.msra.mxu0 0.0
  %631 = vmatprep.subr.mxu0 0.0
  %632 = vmatpush2.msra.mxu0 0.0
  %633 = vmatprep.subr.mxu0 0.0
  %634 = vmatpush2.msra.mxu0 0.0
  %635 = vmatprep.subr.mxu0 0.0
  %636 = vmatpush2.msra.mxu0 0.0
  %637 = vmatprep.mubr.f32.mxu0 0.0
  %638 = vmatmul.mubr.f32.gmra.mxu0 %v565
  %v639 = vpop.f32.mrf.mxu0
  %v640 = vadd.f32 0.0, %v639
  %v641 = vpop.f32.mrf.mxu0
  %v642 = vadd.f32 0.0, %v641
  %643 = vdwg.mxu0
  %v644 = vadd.f32 %v553, %v640
  %v645 = vadd.f32 %v554, %v642
  %646 = vrot.lane.b32.xlu0 %v15, 95
  %v647 = vpop.permute.xlu0 %646
  %648 = vrot.lane.b32.xlu0 %v18, 95
  %v649 = vpop.permute.xlu0 %648
  %vm650 = vcmp.lt.s32.totalorder %v25, 95
  %v651 = vsel %vm650, %v647, %v649
  %v652 = vsel %vm650, %v649, %v647
  %s653 = scalar_lea.vmem %s1, 14
  %v654 = vld [vmem:[%s653] sm:$0x3]
  %v656 = vsel %vm31, %v654, 0
  %v659 = vsel %vm35, %v651, 0
  %v662 = vsel %vm35, %v652, 0
  %664 = vmatprep.subr.mxu0 0.0
  %665 = vmatpush1.msra.mxu0 0.0
  %666 = vmatprep.subr.mxu0 0.0
  %667 = vmatpush1.msra.mxu0 0.0
  %668 = vmatprep.subr.mxu0 0.0
  %669 = vmatpush1.msra.mxu0 0.0
  %670 = vmatprep.subr.mxu0 0.0
  %671 = vmatpush1.msra.mxu0 0.0
  %672 = vmatprep.subr.mxu0 0.0
  %673 = vmatpush1.msra.mxu0 0.0
  %674 = vmatprep.subr.mxu0 0.0
  %675 = vmatpush1.msra.mxu0 0.0
  %676 = vmatprep.subr.mxu0 0.0
  %677 = vmatpush1.msra.mxu0 0.0
  %678 = vmatprep.subr.mxu0 0.0
  %679 = vmatpush1.msra.mxu0 0.0
  %680 = vmatprep.subr.mxu0 0.0
  %681 = vmatpush1.msra.mxu0 0.0
  %682 = vmatprep.subr.mxu0 0.0
  %683 = vmatpush1.msra.mxu0 0.0
  %684 = vmatprep.subr.mxu0 0.0
  %685 = vmatpush1.msra.mxu0 0.0
  %686 = vmatprep.subr.mxu0 0.0
  %687 = vmatpush1.msra.mxu0 0.0
  %688 = vmatprep.subr.mxu0 0.0
  %689 = vmatpush1.msra.mxu0 0.0
  %690 = vmatprep.subr.mxu0 0.0
  %691 = vmatpush1.msra.mxu0 0.0
  %692 = vmatprep.subr.mxu0 0.0
  %693 = vmatpush1.msra.mxu0 0.0
  %694 = vmatprep.subr.mxu0 %v662
  %695 = vmatpush1.msra.mxu0 %v659
  %696 = vmatprep.subr.mxu0 0.0
  %697 = vmatpush2.msra.mxu0 0.0
  %698 = vmatprep.subr.mxu0 0.0
  %699 = vmatpush2.msra.mxu0 0.0
  %700 = vmatprep.subr.mxu0 0.0
  %701 = vmatpush2.msra.mxu0 0.0
  %702 = vmatprep.subr.mxu0 0.0
  %703 = vmatpush2.msra.mxu0 0.0
  %704 = vmatprep.subr.mxu0 0.0
  %705 = vmatpush2.msra.mxu0 0.0
  %706 = vmatprep.subr.mxu0 0.0
  %707 = vmatpush2.msra.mxu0 0.0
  %708 = vmatprep.subr.mxu0 0.0
  %709 = vmatpush2.msra.mxu0 0.0
  %710 = vmatprep.subr.mxu0 0.0
  %711 = vmatpush2.msra.mxu0 0.0
  %712 = vmatprep.subr.mxu0 0.0
  %713 = vmatpush2.msra.mxu0 0.0
  %714 = vmatprep.subr.mxu0 0.0
  %715 = vmatpush2.msra.mxu0 0.0
  %716 = vmatprep.subr.mxu0 0.0
  %717 = vmatpush2.msra.mxu0 0.0
  %718 = vmatprep.subr.mxu0 0.0
  %719 = vmatpush2.msra.mxu0 0.0
  %720 = vmatprep.subr.mxu0 0.0
  %721 = vmatpush2.msra.mxu0 0.0
  %722 = vmatprep.subr.mxu0 0.0
  %723 = vmatpush2.msra.mxu0 0.0
  %724 = vmatprep.subr.mxu0 0.0
  %725 = vmatpush2.msra.mxu0 0.0
  %726 = vmatprep.subr.mxu0 0.0
  %727 = vmatpush2.msra.mxu0 0.0
  %728 = vmatprep.mubr.f32.mxu0 0.0
  %729 = vmatmul.mubr.f32.gmra.mxu0 %v656
  %v730 = vpop.f32.mrf.mxu0
  %v731 = vadd.f32 0.0, %v730
  %v732 = vpop.f32.mrf.mxu0
  %v733 = vadd.f32 0.0, %v732
  %734 = vdwg.mxu0
  %v735 = vadd.f32 %v644, %v731
  %v736 = vadd.f32 %v645, %v733
  %737 = vrot.lane.b32.xlu0 %v15, 94
  %v738 = vpop.permute.xlu0 %737
  %739 = vrot.lane.b32.xlu0 %v18, 94
  %v740 = vpop.permute.xlu0 %739
  %vm741 = vcmp.lt.s32.totalorder %v25, 94
  %v742 = vsel %vm741, %v738, %v740
  %v743 = vsel %vm741, %v740, %v738
  %s744 = scalar_lea.vmem %s1, 16
  %v745 = vld [vmem:[%s744] sm:$0x3]
  %v747 = vsel %vm31, %v745, 0
  %v750 = vsel %vm35, %v742, 0
  %v753 = vsel %vm35, %v743, 0
  %755 = vmatprep.subr.mxu0 0.0
  %756 = vmatpush1.msra.mxu0 0.0
  %757 = vmatprep.subr.mxu0 0.0
  %758 = vmatpush1.msra.mxu0 0.0
  %759 = vmatprep.subr.mxu0 0.0
  %760 = vmatpush1.msra.mxu0 0.0
  %761 = vmatprep.subr.mxu0 0.0
  %762 = vmatpush1.msra.mxu0 0.0
  %763 = vmatprep.subr.mxu0 0.0
  %764 = vmatpush1.msra.mxu0 0.0
  %765 = vmatprep.subr.mxu0 0.0
  %766 = vmatpush1.msra.mxu0 0.0
  %767 = vmatprep.subr.mxu0 0.0
  %768 = vmatpush1.msra.mxu0 0.0
  %769 = vmatprep.subr.mxu0 0.0
  %770 = vmatpush1.msra.mxu0 0.0
  %771 = vmatprep.subr.mxu0 0.0
  %772 = vmatpush1.msra.mxu0 0.0
  %773 = vmatprep.subr.mxu0 0.0
  %774 = vmatpush1.msra.mxu0 0.0
  %775 = vmatprep.subr.mxu0 0.0
  %776 = vmatpush1.msra.mxu0 0.0
  %777 = vmatprep.subr.mxu0 0.0
  %778 = vmatpush1.msra.mxu0 0.0
  %779 = vmatprep.subr.mxu0 0.0
  %780 = vmatpush1.msra.mxu0 0.0
  %781 = vmatprep.subr.mxu0 0.0
  %782 = vmatpush1.msra.mxu0 0.0
  %783 = vmatprep.subr.mxu0 0.0
  %784 = vmatpush1.msra.mxu0 0.0
  %785 = vmatprep.subr.mxu0 %v753
  %786 = vmatpush1.msra.mxu0 %v750
  %787 = vmatprep.subr.mxu0 0.0
  %788 = vmatpush2.msra.mxu0 0.0
  %789 = vmatprep.subr.mxu0 0.0
  %790 = vmatpush2.msra.mxu0 0.0
  %791 = vmatprep.subr.mxu0 0.0
  %792 = vmatpush2.msra.mxu0 0.0
  %793 = vmatprep.subr.mxu0 0.0
  %794 = vmatpush2.msra.mxu0 0.0
  %795 = vmatprep.subr.mxu0 0.0
  %796 = vmatpush2.msra.mxu0 0.0
  %797 = vmatprep.subr.mxu0 0.0
  %798 = vmatpush2.msra.mxu0 0.0
  %799 = vmatprep.subr.mxu0 0.0
  %800 = vmatpush2.msra.mxu0 0.0
  %801 = vmatprep.subr.mxu0 0.0
  %802 = vmatpush2.msra.mxu0 0.0
  %803 = vmatprep.subr.mxu0 0.0
  %804 = vmatpush2.msra.mxu0 0.0
  %805 = vmatprep.subr.mxu0 0.0
  %806 = vmatpush2.msra.mxu0 0.0
  %807 = vmatprep.subr.mxu0 0.0
  %808 = vmatpush2.msra.mxu0 0.0
  %809 = vmatprep.subr.mxu0 0.0
  %810 = vmatpush2.msra.mxu0 0.0
  %811 = vmatprep.subr.mxu0 0.0
  %812 = vmatpush2.msra.mxu0 0.0
  %813 = vmatprep.subr.mxu0 0.0
  %814 = vmatpush2.msra.mxu0 0.0
  %815 = vmatprep.subr.mxu0 0.0
  %816 = vmatpush2.msra.mxu0 0.0
  %817 = vmatprep.subr.mxu0 0.0
  %818 = vmatpush2.msra.mxu0 0.0
  %819 = vmatprep.mubr.f32.mxu0 0.0
  %820 = vmatmul.mubr.f32.gmra.mxu0 %v747
  %v821 = vpop.f32.mrf.mxu0
  %v822 = vadd.f32 0.0, %v821
  %v823 = vpop.f32.mrf.mxu0
  %v824 = vadd.f32 0.0, %v823
  %825 = vdwg.mxu0
  %v826 = vadd.f32 %v735, %v822
  %v827 = vadd.f32 %v736, %v824
  %829 = vset.pattern.permute.xlu0 0
  %830 = vperm.xlu0 %829, %v14
  %v831 = vpop.permute.xlu0 %830
  %v833 = vadd.f32 %v826, %v831
  %v834 = vadd.f32 %v827, %v831
  %v837 = vcombine.low %v833, %v834
  %839 = vst [vmem:[%s3] sm:$0x33] %v837
  %v840 = vld [vmem:[%s0] sm:$0xcc]
  %v841 = vld [vmem:[%s1] sm:$0x3]
  %v843 = vcombine.high %v840, %v840
  %v844 = vrot.slane %v840, 2
  %v845 = vrot.slane %v843, 2
  %848 = vrot.lane.b32.xlu0 %v844, 127
  %v849 = vpop.permute.xlu0 %848
  %850 = vrot.lane.b32.xlu0 %v845, 127
  %v851 = vpop.permute.xlu0 %850
  %v852 = vsel %vm26, %v849, %v851
  %v853 = vsel %vm26, %v851, %v849
  %v854 = vld [vmem:[%s29] sm:$0x3]
  %v856 = vsel %vm31, %v854, 0
  %v859 = vsel %vm35, %v852, 0
  %v862 = vsel %vm35, %v853, 0
  %864 = vmatprep.subr.mxu0 0.0
  %865 = vmatpush1.msra.mxu0 0.0
  %866 = vmatprep.subr.mxu0 0.0
  %867 = vmatpush1.msra.mxu0 0.0
  %868 = vmatprep.subr.mxu0 0.0
  %869 = vmatpush1.msra.mxu0 0.0
  %870 = vmatprep.subr.mxu0 0.0
  %871 = vmatpush1.msra.mxu0 0.0
  %872 = vmatprep.subr.mxu0 0.0
  %873 = vmatpush1.msra.mxu0 0.0
  %874 = vmatprep.subr.mxu0 0.0
  %875 = vmatpush1.msra.mxu0 0.0
  %876 = vmatprep.subr.mxu0 0.0
  %877 = vmatpush1.msra.mxu0 0.0
  %878 = vmatprep.subr.mxu0 0.0
  %879 = vmatpush1.msra.mxu0 0.0
  %880 = vmatprep.subr.mxu0 0.0
  %881 = vmatpush1.msra.mxu0 0.0
  %882 = vmatprep.subr.mxu0 0.0
  %883 = vmatpush1.msra.mxu0 0.0
  %884 = vmatprep.subr.mxu0 0.0
  %885 = vmatpush1.msra.mxu0 0.0
  %886 = vmatprep.subr.mxu0 0.0
  %887 = vmatpush1.msra.mxu0 0.0
  %888 = vmatprep.subr.mxu0 0.0
  %889 = vmatpush1.msra.mxu0 0.0
  %890 = vmatprep.subr.mxu0 0.0
  %891 = vmatpush1.msra.mxu0 0.0
  %892 = vmatprep.subr.mxu0 0.0
  %893 = vmatpush1.msra.mxu0 0.0
  %894 = vmatprep.subr.mxu0 %v862
  %895 = vmatpush1.msra.mxu0 %v859
  %896 = vmatprep.subr.mxu0 0.0
  %897 = vmatpush2.msra.mxu0 0.0
  %898 = vmatprep.subr.mxu0 0.0
  %899 = vmatpush2.msra.mxu0 0.0
  %900 = vmatprep.subr.mxu0 0.0
  %901 = vmatpush2.msra.mxu0 0.0
  %902 = vmatprep.subr.mxu0 0.0
  %903 = vmatpush2.msra.mxu0 0.0
  %904 = vmatprep.subr.mxu0 0.0
  %905 = vmatpush2.msra.mxu0 0.0
  %906 = vmatprep.subr.mxu0 0.0
  %907 = vmatpush2.msra.mxu0 0.0
  %908 = vmatprep.subr.mxu0 0.0
  %909 = vmatpush2.msra.mxu0 0.0
  %910 = vmatprep.subr.mxu0 0.0
  %911 = vmatpush2.msra.mxu0 0.0
  %912 = vmatprep.subr.mxu0 0.0
  %913 = vmatpush2.msra.mxu0 0.0
  %914 = vmatprep.subr.mxu0 0.0
  %915 = vmatpush2.msra.mxu0 0.0
  %916 = vmatprep.subr.mxu0 0.0
  %917 = vmatpush2.msra.mxu0 0.0
  %918 = vmatprep.subr.mxu0 0.0
  %919 = vmatpush2.msra.mxu0 0.0
  %920 = vmatprep.subr.mxu0 0.0
  %921 = vmatpush2.msra.mxu0 0.0
  %922 = vmatprep.subr.mxu0 0.0
  %923 = vmatpush2.msra.mxu0 0.0
  %924 = vmatprep.subr.mxu0 0.0
  %925 = vmatpush2.msra.mxu0 0.0
  %926 = vmatprep.subr.mxu0 0.0
  %927 = vmatpush2.msra.mxu0 0.0
  %928 = vmatprep.mubr.f32.mxu0 0.0
  %929 = vmatmul.mubr.f32.gmra.mxu0 %v856
  %v930 = vpop.f32.mrf.mxu0
  %v931 = vadd.f32 0.0, %v930
  %v932 = vpop.f32.mrf.mxu0
  %v933 = vadd.f32 0.0, %v932
  %934 = vdwg.mxu0
  %v936 = vsel %vm31, %v841, 0
  %v938 = vsel %vm35, %v844, 0
  %v940 = vsel %vm35, %v845, 0
  %942 = vmatprep.subr.mxu0 0.0
  %943 = vmatpush1.msra.mxu0 0.0
  %944 = vmatprep.subr.mxu0 0.0
  %945 = vmatpush1.msra.mxu0 0.0
  %946 = vmatprep.subr.mxu0 0.0
  %947 = vmatpush1.msra.mxu0 0.0
  %948 = vmatprep.subr.mxu0 0.0
  %949 = vmatpush1.msra.mxu0 0.0
  %950 = vmatprep.subr.mxu0 0.0
  %951 = vmatpush1.msra.mxu0 0.0
  %952 = vmatprep.subr.mxu0 0.0
  %953 = vmatpush1.msra.mxu0 0.0
  %954 = vmatprep.subr.mxu0 0.0
  %955 = vmatpush1.msra.mxu0 0.0
  %956 = vmatprep.subr.mxu0 0.0
  %957 = vmatpush1.msra.mxu0 0.0
  %958 = vmatprep.subr.mxu0 0.0
  %959 = vmatpush1.msra.mxu0 0.0
  %960 = vmatprep.subr.mxu0 0.0
  %961 = vmatpush1.msra.mxu0 0.0
  %962 = vmatprep.subr.mxu0 0.0
  %963 = vmatpush1.msra.mxu0 0.0
  %964 = vmatprep.subr.mxu0 0.0
  %965 = vmatpush1.msra.mxu0 0.0
  %966 = vmatprep.subr.mxu0 0.0
  %967 = vmatpush1.msra.mxu0 0.0
  %968 = vmatprep.subr.mxu0 0.0
  %969 = vmatpush1.msra.mxu0 0.0
  %970 = vmatprep.subr.mxu0 0.0
  %971 = vmatpush1.msra.mxu0 0.0
  %972 = vmatprep.subr.mxu0 %v940
  %973 = vmatpush1.msra.mxu0 %v938
  %974 = vmatprep.subr.mxu0 0.0
  %975 = vmatpush2.msra.mxu0 0.0
  %976 = vmatprep.subr.mxu0 0.0
  %977 = vmatpush2.msra.mxu0 0.0
  %978 = vmatprep.subr.mxu0 0.0
  %979 = vmatpush2.msra.mxu0 0.0
  %980 = vmatprep.subr.mxu0 0.0
  %981 = vmatpush2.msra.mxu0 0.0
  %982 = vmatprep.subr.mxu0 0.0
  %983 = vmatpush2.msra.mxu0 0.0
  %984 = vmatprep.subr.mxu0 0.0
  %985 = vmatpush2.msra.mxu0 0.0
  %986 = vmatprep.subr.mxu0 0.0
  %987 = vmatpush2.msra.mxu0 0.0
  %988 = vmatprep.subr.mxu0 0.0
  %989 = vmatpush2.msra.mxu0 0.0
  %990 = vmatprep.subr.mxu0 0.0
  %991 = vmatpush2.msra.mxu0 0.0
  %992 = vmatprep.subr.mxu0 0.0
  %993 = vmatpush2.msra.mxu0 0.0
  %994 = vmatprep.subr.mxu0 0.0
  %995 = vmatpush2.msra.mxu0 0.0
  %996 = vmatprep.subr.mxu0 0.0
  %997 = vmatpush2.msra.mxu0 0.0
  %998 = vmatprep.subr.mxu0 0.0
  %999 = vmatpush2.msra.mxu0 0.0
  %1000 = vmatprep.subr.mxu0 0.0
  %1001 = vmatpush2.msra.mxu0 0.0
  %1002 = vmatprep.subr.mxu0 0.0
  %1003 = vmatpush2.msra.mxu0 0.0
  %1004 = vmatprep.subr.mxu0 0.0
  %1005 = vmatpush2.msra.mxu0 0.0
  %1006 = vmatprep.mubr.f32.mxu0 0.0
  %1007 = vmatmul.mubr.f32.gmra.mxu0 %v936
  %v1008 = vpop.f32.mrf.mxu0
  %v1009 = vadd.f32 %v931, %v1008
  %v1010 = vpop.f32.mrf.mxu0
  %v1011 = vadd.f32 %v933, %v1010
  %1012 = vdwg.mxu0
  %1013 = vrot.lane.b32.xlu0 %v844, 126
  %v1014 = vpop.permute.xlu0 %1013
  %1015 = vrot.lane.b32.xlu0 %v845, 126
  %v1016 = vpop.permute.xlu0 %1015
  %v1017 = vsel %vm195, %v1014, %v1016
  %v1018 = vsel %vm195, %v1016, %v1014
  %v1019 = vld [vmem:[%s198] sm:$0x3]
  %v1021 = vsel %vm31, %v1019, 0
  %v1024 = vsel %vm35, %v1017, 0
  %v1027 = vsel %vm35, %v1018, 0
  %1029 = vmatprep.subr.mxu0 0.0
  %1030 = vmatpush1.msra.mxu0 0.0
  %1031 = vmatprep.subr.mxu0 0.0
  %1032 = vmatpush1.msra.mxu0 0.0
  %1033 = vmatprep.subr.mxu0 0.0
  %1034 = vmatpush1.msra.mxu0 0.0
  %1035 = vmatprep.subr.mxu0 0.0
  %1036 = vmatpush1.msra.mxu0 0.0
  %1037 = vmatprep.subr.mxu0 0.0
  %1038 = vmatpush1.msra.mxu0 0.0
  %1039 = vmatprep.subr.mxu0 0.0
  %1040 = vmatpush1.msra.mxu0 0.0
  %1041 = vmatprep.subr.mxu0 0.0
  %1042 = vmatpush1.msra.mxu0 0.0
  %1043 = vmatprep.subr.mxu0 0.0
  %1044 = vmatpush1.msra.mxu0 0.0
  %1045 = vmatprep.subr.mxu0 0.0
  %1046 = vmatpush1.msra.mxu0 0.0
  %1047 = vmatprep.subr.mxu0 0.0
  %1048 = vmatpush1.msra.mxu0 0.0
  %1049 = vmatprep.subr.mxu0 0.0
  %1050 = vmatpush1.msra.mxu0 0.0
  %1051 = vmatprep.subr.mxu0 0.0
  %1052 = vmatpush1.msra.mxu0 0.0
  %1053 = vmatprep.subr.mxu0 0.0
  %1054 = vmatpush1.msra.mxu0 0.0
  %1055 = vmatprep.subr.mxu0 0.0
  %1056 = vmatpush1.msra.mxu0 0.0
  %1057 = vmatprep.subr.mxu0 0.0
  %1058 = vmatpush1.msra.mxu0 0.0
  %1059 = vmatprep.subr.mxu0 %v1027
  %1060 = vmatpush1.msra.mxu0 %v1024
  %1061 = vmatprep.subr.mxu0 0.0
  %1062 = vmatpush2.msra.mxu0 0.0
  %1063 = vmatprep.subr.mxu0 0.0
  %1064 = vmatpush2.msra.mxu0 0.0
  %1065 = vmatprep.subr.mxu0 0.0
  %1066 = vmatpush2.msra.mxu0 0.0
  %1067 = vmatprep.subr.mxu0 0.0
  %1068 = vmatpush2.msra.mxu0 0.0
  %1069 = vmatprep.subr.mxu0 0.0
  %1070 = vmatpush2.msra.mxu0 0.0
  %1071 = vmatprep.subr.mxu0 0.0
  %1072 = vmatpush2.msra.mxu0 0.0
  %1073 = vmatprep.subr.mxu0 0.0
  %1074 = vmatpush2.msra.mxu0 0.0
  %1075 = vmatprep.subr.mxu0 0.0
  %1076 = vmatpush2.msra.mxu0 0.0
  %1077 = vmatprep.subr.mxu0 0.0
  %1078 = vmatpush2.msra.mxu0 0.0
  %1079 = vmatprep.subr.mxu0 0.0
  %1080 = vmatpush2.msra.mxu0 0.0
  %1081 = vmatprep.subr.mxu0 0.0
  %1082 = vmatpush2.msra.mxu0 0.0
  %1083 = vmatprep.subr.mxu0 0.0
  %1084 = vmatpush2.msra.mxu0 0.0
  %1085 = vmatprep.subr.mxu0 0.0
  %1086 = vmatpush2.msra.mxu0 0.0
  %1087 = vmatprep.subr.mxu0 0.0
  %1088 = vmatpush2.msra.mxu0 0.0
  %1089 = vmatprep.subr.mxu0 0.0
  %1090 = vmatpush2.msra.mxu0 0.0
  %1091 = vmatprep.subr.mxu0 0.0
  %1092 = vmatpush2.msra.mxu0 0.0
  %1093 = vmatprep.mubr.f32.mxu0 0.0
  %1094 = vmatmul.mubr.f32.gmra.mxu0 %v1021
  %v1095 = vpop.f32.mrf.mxu0
  %v1096 = vadd.f32 0.0, %v1095
  %v1097 = vpop.f32.mrf.mxu0
  %v1098 = vadd.f32 0.0, %v1097
  %1099 = vdwg.mxu0
  %v1100 = vadd.f32 %v1009, %v1096
  %v1101 = vadd.f32 %v1011, %v1098
  %1102 = vrot.lane.b32.xlu0 %v844, 112
  %v1103 = vpop.permute.xlu0 %1102
  %1104 = vrot.lane.b32.xlu0 %v845, 112
  %v1105 = vpop.permute.xlu0 %1104
  %v1106 = vsel %vm286, %v1103, %v1105
  %v1107 = vsel %vm286, %v1105, %v1103
  %v1108 = vld [vmem:[%s289] sm:$0x3]
  %v1110 = vsel %vm31, %v1108, 0
  %v1113 = vsel %vm35, %v1106, 0
  %v1116 = vsel %vm35, %v1107, 0
  %1118 = vmatprep.subr.mxu0 0.0
  %1119 = vmatpush1.msra.mxu0 0.0
  %1120 = vmatprep.subr.mxu0 0.0
  %1121 = vmatpush1.msra.mxu0 0.0
  %1122 = vmatprep.subr.mxu0 0.0
  %1123 = vmatpush1.msra.mxu0 0.0
  %1124 = vmatprep.subr.mxu0 0.0
  %1125 = vmatpush1.msra.mxu0 0.0
  %1126 = vmatprep.subr.mxu0 0.0
  %1127 = vmatpush1.msra.mxu0 0.0
  %1128 = vmatprep.subr.mxu0 0.0
  %1129 = vmatpush1.msra.mxu0 0.0
  %1130 = vmatprep.subr.mxu0 0.0
  %1131 = vmatpush1.msra.mxu0 0.0
  %1132 = vmatprep.subr.mxu0 0.0
  %1133 = vmatpush1.msra.mxu0 0.0
  %1134 = vmatprep.subr.mxu0 0.0
  %1135 = vmatpush1.msra.mxu0 0.0
  %1136 = vmatprep.subr.mxu0 0.0
  %1137 = vmatpush1.msra.mxu0 0.0
  %1138 = vmatprep.subr.mxu0 0.0
  %1139 = vmatpush1.msra.mxu0 0.0
  %1140 = vmatprep.subr.mxu0 0.0
  %1141 = vmatpush1.msra.mxu0 0.0
  %1142 = vmatprep.subr.mxu0 0.0
  %1143 = vmatpush1.msra.mxu0 0.0
  %1144 = vmatprep.subr.mxu0 0.0
  %1145 = vmatpush1.msra.mxu0 0.0
  %1146 = vmatprep.subr.mxu0 0.0
  %1147 = vmatpush1.msra.mxu0 0.0
  %1148 = vmatprep.subr.mxu0 %v1116
  %1149 = vmatpush1.msra.mxu0 %v1113
  %1150 = vmatprep.subr.mxu0 0.0
  %1151 = vmatpush2.msra.mxu0 0.0
  %1152 = vmatprep.subr.mxu0 0.0
  %1153 = vmatpush2.msra.mxu0 0.0
  %1154 = vmatprep.subr.mxu0 0.0
  %1155 = vmatpush2.msra.mxu0 0.0
  %1156 = vmatprep.subr.mxu0 0.0
  %1157 = vmatpush2.msra.mxu0 0.0
  %1158 = vmatprep.subr.mxu0 0.0
  %1159 = vmatpush2.msra.mxu0 0.0
  %1160 = vmatprep.subr.mxu0 0.0
  %1161 = vmatpush2.msra.mxu0 0.0
  %1162 = vmatprep.subr.mxu0 0.0
  %1163 = vmatpush2.msra.mxu0 0.0
  %1164 = vmatprep.subr.mxu0 0.0
  %1165 = vmatpush2.msra.mxu0 0.0
  %1166 = vmatprep.subr.mxu0 0.0
  %1167 = vmatpush2.msra.mxu0 0.0
  %1168 = vmatprep.subr.mxu0 0.0
  %1169 = vmatpush2.msra.mxu0 0.0
  %1170 = vmatprep.subr.mxu0 0.0
  %1171 = vmatpush2.msra.mxu0 0.0
  %1172 = vmatprep.subr.mxu0 0.0
  %1173 = vmatpush2.msra.mxu0 0.0
  %1174 = vmatprep.subr.mxu0 0.0
  %1175 = vmatpush2.msra.mxu0 0.0
  %1176 = vmatprep.subr.mxu0 0.0
  %1177 = vmatpush2.msra.mxu0 0.0
  %1178 = vmatprep.subr.mxu0 0.0
  %1179 = vmatpush2.msra.mxu0 0.0
  %1180 = vmatprep.subr.mxu0 0.0
  %1181 = vmatpush2.msra.mxu0 0.0
  %1182 = vmatprep.mubr.f32.mxu0 0.0
  %1183 = vmatmul.mubr.f32.gmra.mxu0 %v1110
  %v1184 = vpop.f32.mrf.mxu0
  %v1185 = vadd.f32 0.0, %v1184
  %v1186 = vpop.f32.mrf.mxu0
  %v1187 = vadd.f32 0.0, %v1186
  %1188 = vdwg.mxu0
  %v1189 = vadd.f32 %v1100, %v1185
  %v1190 = vadd.f32 %v1101, %v1187
  %1191 = vrot.lane.b32.xlu0 %v844, 111
  %v1192 = vpop.permute.xlu0 %1191
  %1193 = vrot.lane.b32.xlu0 %v845, 111
  %v1194 = vpop.permute.xlu0 %1193
  %v1195 = vsel %vm377, %v1192, %v1194
  %v1196 = vsel %vm377, %v1194, %v1192
  %v1197 = vld [vmem:[%s380] sm:$0x3]
  %v1199 = vsel %vm31, %v1197, 0
  %v1202 = vsel %vm35, %v1195, 0
  %v1205 = vsel %vm35, %v1196, 0
  %1207 = vmatprep.subr.mxu0 0.0
  %1208 = vmatpush1.msra.mxu0 0.0
  %1209 = vmatprep.subr.mxu0 0.0
  %1210 = vmatpush1.msra.mxu0 0.0
  %1211 = vmatprep.subr.mxu0 0.0
  %1212 = vmatpush1.msra.mxu0 0.0
  %1213 = vmatprep.subr.mxu0 0.0
  %1214 = vmatpush1.msra.mxu0 0.0
  %1215 = vmatprep.subr.mxu0 0.0
  %1216 = vmatpush1.msra.mxu0 0.0
  %1217 = vmatprep.subr.mxu0 0.0
  %1218 = vmatpush1.msra.mxu0 0.0
  %1219 = vmatprep.subr.mxu0 0.0
  %1220 = vmatpush1.msra.mxu0 0.0
  %1221 = vmatprep.subr.mxu0 0.0
  %1222 = vmatpush1.msra.mxu0 0.0
  %1223 = vmatprep.subr.mxu0 0.0
  %1224 = vmatpush1.msra.mxu0 0.0
  %1225 = vmatprep.subr.mxu0 0.0
  %1226 = vmatpush1.msra.mxu0 0.0
  %1227 = vmatprep.subr.mxu0 0.0
  %1228 = vmatpush1.msra.mxu0 0.0
  %1229 = vmatprep.subr.mxu0 0.0
  %1230 = vmatpush1.msra.mxu0 0.0
  %1231 = vmatprep.subr.mxu0 0.0
  %1232 = vmatpush1.msra.mxu0 0.0
  %1233 = vmatprep.subr.mxu0 0.0
  %1234 = vmatpush1.msra.mxu0 0.0
  %1235 = vmatprep.subr.mxu0 0.0
  %1236 = vmatpush1.msra.mxu0 0.0
  %1237 = vmatprep.subr.mxu0 %v1205
  %1238 = vmatpush1.msra.mxu0 %v1202
  %1239 = vmatprep.subr.mxu0 0.0
  %1240 = vmatpush2.msra.mxu0 0.0
  %1241 = vmatprep.subr.mxu0 0.0
  %1242 = vmatpush2.msra.mxu0 0.0
  %1243 = vmatprep.subr.mxu0 0.0
  %1244 = vmatpush2.msra.mxu0 0.0
  %1245 = vmatprep.subr.mxu0 0.0
  %1246 = vmatpush2.msra.mxu0 0.0
  %1247 = vmatprep.subr.mxu0 0.0
  %1248 = vmatpush2.msra.mxu0 0.0
  %1249 = vmatprep.subr.mxu0 0.0
  %1250 = vmatpush2.msra.mxu0 0.0
  %1251 = vmatprep.subr.mxu0 0.0
  %1252 = vmatpush2.msra.mxu0 0.0
  %1253 = vmatprep.subr.mxu0 0.0
  %1254 = vmatpush2.msra.mxu0 0.0
  %1255 = vmatprep.subr.mxu0 0.0
  %1256 = vmatpush2.msra.mxu0 0.0
  %1257 = vmatprep.subr.mxu0 0.0
  %1258 = vmatpush2.msra.mxu0 0.0
  %1259 = vmatprep.subr.mxu0 0.0
  %1260 = vmatpush2.msra.mxu0 0.0
  %1261 = vmatprep.subr.mxu0 0.0
  %1262 = vmatpush2.msra.mxu0 0.0
  %1263 = vmatprep.subr.mxu0 0.0
  %1264 = vmatpush2.msra.mxu0 0.0
  %1265 = vmatprep.subr.mxu0 0.0
  %1266 = vmatpush2.msra.mxu0 0.0
  %1267 = vmatprep.subr.mxu0 0.0
  %1268 = vmatpush2.msra.mxu0 0.0
  %1269 = vmatprep.subr.mxu0 0.0
  %1270 = vmatpush2.msra.mxu0 0.0
  %1271 = vmatprep.mubr.f32.mxu0 0.0
  %1272 = vmatmul.mubr.f32.gmra.mxu0 %v1199
  %v1273 = vpop.f32.mrf.mxu0
  %v1274 = vadd.f32 0.0, %v1273
  %v1275 = vpop.f32.mrf.mxu0
  %v1276 = vadd.f32 0.0, %v1275
  %1277 = vdwg.mxu0
  %v1278 = vadd.f32 %v1189, %v1274
  %v1279 = vadd.f32 %v1190, %v1276
  %1280 = vrot.lane.b32.xlu0 %v844, 110
  %v1281 = vpop.permute.xlu0 %1280
  %1282 = vrot.lane.b32.xlu0 %v845, 110
  %v1283 = vpop.permute.xlu0 %1282
  %v1284 = vsel %vm468, %v1281, %v1283
  %v1285 = vsel %vm468, %v1283, %v1281
  %v1286 = vld [vmem:[%s471] sm:$0x3]
  %v1288 = vsel %vm31, %v1286, 0
  %v1291 = vsel %vm35, %v1284, 0
  %v1294 = vsel %vm35, %v1285, 0
  %1296 = vmatprep.subr.mxu0 0.0
  %1297 = vmatpush1.msra.mxu0 0.0
  %1298 = vmatprep.subr.mxu0 0.0
  %1299 = vmatpush1.msra.mxu0 0.0
  %1300 = vmatprep.subr.mxu0 0.0
  %1301 = vmatpush1.msra.mxu0 0.0
  %1302 = vmatprep.subr.mxu0 0.0
  %1303 = vmatpush1.msra.mxu0 0.0
  %1304 = vmatprep.subr.mxu0 0.0
  %1305 = vmatpush1.msra.mxu0 0.0
  %1306 = vmatprep.subr.mxu0 0.0
  %1307 = vmatpush1.msra.mxu0 0.0
  %1308 = vmatprep.subr.mxu0 0.0
  %1309 = vmatpush1.msra.mxu0 0.0
  %1310 = vmatprep.subr.mxu0 0.0
  %1311 = vmatpush1.msra.mxu0 0.0
  %1312 = vmatprep.subr.mxu0 0.0
  %1313 = vmatpush1.msra.mxu0 0.0
  %1314 = vmatprep.subr.mxu0 0.0
  %1315 = vmatpush1.msra.mxu0 0.0
  %1316 = vmatprep.subr.mxu0 0.0
  %1317 = vmatpush1.msra.mxu0 0.0
  %1318 = vmatprep.subr.mxu0 0.0
  %1319 = vmatpush1.msra.mxu0 0.0
  %1320 = vmatprep.subr.mxu0 0.0
  %1321 = vmatpush1.msra.mxu0 0.0
  %1322 = vmatprep.subr.mxu0 0.0
  %1323 = vmatpush1.msra.mxu0 0.0
  %1324 = vmatprep.subr.mxu0 0.0
  %1325 = vmatpush1.msra.mxu0 0.0
  %1326 = vmatprep.subr.mxu0 %v1294
  %1327 = vmatpush1.msra.mxu0 %v1291
  %1328 = vmatprep.subr.mxu0 0.0
  %1329 = vmatpush2.msra.mxu0 0.0
  %1330 = vmatprep.subr.mxu0 0.0
  %1331 = vmatpush2.msra.mxu0 0.0
  %1332 = vmatprep.subr.mxu0 0.0
  %1333 = vmatpush2.msra.mxu0 0.0
  %1334 = vmatprep.subr.mxu0 0.0
  %1335 = vmatpush2.msra.mxu0 0.0
  %1336 = vmatprep.subr.mxu0 0.0
  %1337 = vmatpush2.msra.mxu0 0.0
  %1338 = vmatprep.subr.mxu0 0.0
  %1339 = vmatpush2.msra.mxu0 0.0
  %1340 = vmatprep.subr.mxu0 0.0
  %1341 = vmatpush2.msra.mxu0 0.0
  %1342 = vmatprep.subr.mxu0 0.0
  %1343 = vmatpush2.msra.mxu0 0.0
  %1344 = vmatprep.subr.mxu0 0.0
  %1345 = vmatpush2.msra.mxu0 0.0
  %1346 = vmatprep.subr.mxu0 0.0
  %1347 = vmatpush2.msra.mxu0 0.0
  %1348 = vmatprep.subr.mxu0 0.0
  %1349 = vmatpush2.msra.mxu0 0.0
  %1350 = vmatprep.subr.mxu0 0.0
  %1351 = vmatpush2.msra.mxu0 0.0
  %1352 = vmatprep.subr.mxu0 0.0
  %1353 = vmatpush2.msra.mxu0 0.0
  %1354 = vmatprep.subr.mxu0 0.0
  %1355 = vmatpush2.msra.mxu0 0.0
  %1356 = vmatprep.subr.mxu0 0.0
  %1357 = vmatpush2.msra.mxu0 0.0
  %1358 = vmatprep.subr.mxu0 0.0
  %1359 = vmatpush2.msra.mxu0 0.0
  %1360 = vmatprep.mubr.f32.mxu0 0.0
  %1361 = vmatmul.mubr.f32.gmra.mxu0 %v1288
  %v1362 = vpop.f32.mrf.mxu0
  %v1363 = vadd.f32 0.0, %v1362
  %v1364 = vpop.f32.mrf.mxu0
  %v1365 = vadd.f32 0.0, %v1364
  %1366 = vdwg.mxu0
  %v1367 = vadd.f32 %v1278, %v1363
  %v1368 = vadd.f32 %v1279, %v1365
  %1369 = vrot.lane.b32.xlu0 %v844, 96
  %v1370 = vpop.permute.xlu0 %1369
  %1371 = vrot.lane.b32.xlu0 %v845, 96
  %v1372 = vpop.permute.xlu0 %1371
  %v1373 = vsel %vm559, %v1370, %v1372
  %v1374 = vsel %vm559, %v1372, %v1370
  %v1375 = vld [vmem:[%s562] sm:$0x3]
  %v1377 = vsel %vm31, %v1375, 0
  %v1380 = vsel %vm35, %v1373, 0
  %v1383 = vsel %vm35, %v1374, 0
  %1385 = vmatprep.subr.mxu0 0.0
  %1386 = vmatpush1.msra.mxu0 0.0
  %1387 = vmatprep.subr.mxu0 0.0
  %1388 = vmatpush1.msra.mxu0 0.0
  %1389 = vmatprep.subr.mxu0 0.0
  %1390 = vmatpush1.msra.mxu0 0.0
  %1391 = vmatprep.subr.mxu0 0.0
  %1392 = vmatpush1.msra.mxu0 0.0
  %1393 = vmatprep.subr.mxu0 0.0
  %1394 = vmatpush1.msra.mxu0 0.0
  %1395 = vmatprep.subr.mxu0 0.0
  %1396 = vmatpush1.msra.mxu0 0.0
  %1397 = vmatprep.subr.mxu0 0.0
  %1398 = vmatpush1.msra.mxu0 0.0
  %1399 = vmatprep.subr.mxu0 0.0
  %1400 = vmatpush1.msra.mxu0 0.0
  %1401 = vmatprep.subr.mxu0 0.0
  %1402 = vmatpush1.msra.mxu0 0.0
  %1403 = vmatprep.subr.mxu0 0.0
  %1404 = vmatpush1.msra.mxu0 0.0
  %1405 = vmatprep.subr.mxu0 0.0
  %1406 = vmatpush1.msra.mxu0 0.0
  %1407 = vmatprep.subr.mxu0 0.0
  %1408 = vmatpush1.msra.mxu0 0.0
  %1409 = vmatprep.subr.mxu0 0.0
  %1410 = vmatpush1.msra.mxu0 0.0
  %1411 = vmatprep.subr.mxu0 0.0
  %1412 = vmatpush1.msra.mxu0 0.0
  %1413 = vmatprep.subr.mxu0 0.0
  %1414 = vmatpush1.msra.mxu0 0.0
  %1415 = vmatprep.subr.mxu0 %v1383
  %1416 = vmatpush1.msra.mxu0 %v1380
  %1417 = vmatprep.subr.mxu0 0.0
  %1418 = vmatpush2.msra.mxu0 0.0
  %1419 = vmatprep.subr.mxu0 0.0
  %1420 = vmatpush2.msra.mxu0 0.0
  %1421 = vmatprep.subr.mxu0 0.0
  %1422 = vmatpush2.msra.mxu0 0.0
  %1423 = vmatprep.subr.mxu0 0.0
  %1424 = vmatpush2.msra.mxu0 0.0
  %1425 = vmatprep.subr.mxu0 0.0
  %1426 = vmatpush2.msra.mxu0 0.0
  %1427 = vmatprep.subr.mxu0 0.0
  %1428 = vmatpush2.msra.mxu0 0.0
  %1429 = vmatprep.subr.mxu0 0.0
  %1430 = vmatpush2.msra.mxu0 0.0
  %1431 = vmatprep.subr.mxu0 0.0
  %1432 = vmatpush2.msra.mxu0 0.0
  %1433 = vmatprep.subr.mxu0 0.0
  %1434 = vmatpush2.msra.mxu0 0.0
  %1435 = vmatprep.subr.mxu0 0.0
  %1436 = vmatpush2.msra.mxu0 0.0
  %1437 = vmatprep.subr.mxu0 0.0
  %1438 = vmatpush2.msra.mxu0 0.0
  %1439 = vmatprep.subr.mxu0 0.0
  %1440 = vmatpush2.msra.mxu0 0.0
  %1441 = vmatprep.subr.mxu0 0.0
  %1442 = vmatpush2.msra.mxu0 0.0
  %1443 = vmatprep.subr.mxu0 0.0
  %1444 = vmatpush2.msra.mxu0 0.0
  %1445 = vmatprep.subr.mxu0 0.0
  %1446 = vmatpush2.msra.mxu0 0.0
  %1447 = vmatprep.subr.mxu0 0.0
  %1448 = vmatpush2.msra.mxu0 0.0
  %1449 = vmatprep.mubr.f32.mxu0 0.0
  %1450 = vmatmul.mubr.f32.gmra.mxu0 %v1377
  %v1451 = vpop.f32.mrf.mxu0
  %v1452 = vadd.f32 0.0, %v1451
  %v1453 = vpop.f32.mrf.mxu0
  %v1454 = vadd.f32 0.0, %v1453
  %1455 = vdwg.mxu0
  %v1456 = vadd.f32 %v1367, %v1452
  %v1457 = vadd.f32 %v1368, %v1454
  %1458 = vrot.lane.b32.xlu0 %v844, 95
  %v1459 = vpop.permute.xlu0 %1458
  %1460 = vrot.lane.b32.xlu0 %v845, 95
  %v1461 = vpop.permute.xlu0 %1460
  %v1462 = vsel %vm650, %v1459, %v1461
  %v1463 = vsel %vm650, %v1461, %v1459
  %v1464 = vld [vmem:[%s653] sm:$0x3]
  %v1466 = vsel %vm31, %v1464, 0
  %v1469 = vsel %vm35, %v1462, 0
  %v1472 = vsel %vm35, %v1463, 0
  %1474 = vmatprep.subr.mxu0 0.0
  %1475 = vmatpush1.msra.mxu0 0.0
  %1476 = vmatprep.subr.mxu0 0.0
  %1477 = vmatpush1.msra.mxu0 0.0
  %1478 = vmatprep.subr.mxu0 0.0
  %1479 = vmatpush1.msra.mxu0 0.0
  %1480 = vmatprep.subr.mxu0 0.0
  %1481 = vmatpush1.msra.mxu0 0.0
  %1482 = vmatprep.subr.mxu0 0.0
  %1483 = vmatpush1.msra.mxu0 0.0
  %1484 = vmatprep.subr.mxu0 0.0
  %1485 = vmatpush1.msra.mxu0 0.0
  %1486 = vmatprep.subr.mxu0 0.0
  %1487 = vmatpush1.msra.mxu0 0.0
  %1488 = vmatprep.subr.mxu0 0.0
  %1489 = vmatpush1.msra.mxu0 0.0
  %1490 = vmatprep.subr.mxu0 0.0
  %1491 = vmatpush1.msra.mxu0 0.0
  %1492 = vmatprep.subr.mxu0 0.0
  %1493 = vmatpush1.msra.mxu0 0.0
  %1494 = vmatprep.subr.mxu0 0.0
  %1495 = vmatpush1.msra.mxu0 0.0
  %1496 = vmatprep.subr.mxu0 0.0
  %1497 = vmatpush1.msra.mxu0 0.0
  %1498 = vmatprep.subr.mxu0 0.0
  %1499 = vmatpush1.msra.mxu0 0.0
  %1500 = vmatprep.subr.mxu0 0.0
  %1501 = vmatpush1.msra.mxu0 0.0
  %1502 = vmatprep.subr.mxu0 0.0
  %1503 = vmatpush1.msra.mxu0 0.0
  %1504 = vmatprep.subr.mxu0 %v1472
  %1505 = vmatpush1.msra.mxu0 %v1469
  %1506 = vmatprep.subr.mxu0 0.0
  %1507 = vmatpush2.msra.mxu0 0.0
  %1508 = vmatprep.subr.mxu0 0.0
  %1509 = vmatpush2.msra.mxu0 0.0
  %1510 = vmatprep.subr.mxu0 0.0
  %1511 = vmatpush2.msra.mxu0 0.0
  %1512 = vmatprep.subr.mxu0 0.0
  %1513 = vmatpush2.msra.mxu0 0.0
  %1514 = vmatprep.subr.mxu0 0.0
  %1515 = vmatpush2.msra.mxu0 0.0
  %1516 = vmatprep.subr.mxu0 0.0
  %1517 = vmatpush2.msra.mxu0 0.0
  %1518 = vmatprep.subr.mxu0 0.0
  %1519 = vmatpush2.msra.mxu0 0.0
  %1520 = vmatprep.subr.mxu0 0.0
  %1521 = vmatpush2.msra.mxu0 0.0
  %1522 = vmatprep.subr.mxu0 0.0
  %1523 = vmatpush2.msra.mxu0 0.0
  %1524 = vmatprep.subr.mxu0 0.0
  %1525 = vmatpush2.msra.mxu0 0.0
  %1526 = vmatprep.subr.mxu0 0.0
  %1527 = vmatpush2.msra.mxu0 0.0
  %1528 = vmatprep.subr.mxu0 0.0
  %1529 = vmatpush2.msra.mxu0 0.0
  %1530 = vmatprep.subr.mxu0 0.0
  %1531 = vmatpush2.msra.mxu0 0.0
  %1532 = vmatprep.subr.mxu0 0.0
  %1533 = vmatpush2.msra.mxu0 0.0
  %1534 = vmatprep.subr.mxu0 0.0
  %1535 = vmatpush2.msra.mxu0 0.0
  %1536 = vmatprep.subr.mxu0 0.0
  %1537 = vmatpush2.msra.mxu0 0.0
  %1538 = vmatprep.mubr.f32.mxu0 0.0
  %1539 = vmatmul.mubr.f32.gmra.mxu0 %v1466
  %v1540 = vpop.f32.mrf.mxu0
  %v1541 = vadd.f32 0.0, %v1540
  %v1542 = vpop.f32.mrf.mxu0
  %v1543 = vadd.f32 0.0, %v1542
  %1544 = vdwg.mxu0
  %v1545 = vadd.f32 %v1456, %v1541
  %v1546 = vadd.f32 %v1457, %v1543
  %1547 = vrot.lane.b32.xlu0 %v844, 94
  %v1548 = vpop.permute.xlu0 %1547
  %1549 = vrot.lane.b32.xlu0 %v845, 94
  %v1550 = vpop.permute.xlu0 %1549
  %v1551 = vsel %vm741, %v1548, %v1550
  %v1552 = vsel %vm741, %v1550, %v1548
  %v1553 = vld [vmem:[%s744] sm:$0x3]
  %v1555 = vsel %vm31, %v1553, 0
  %v1558 = vsel %vm35, %v1551, 0
  %v1561 = vsel %vm35, %v1552, 0
  %1563 = vmatprep.subr.mxu0 0.0
  %1564 = vmatpush1.msra.mxu0 0.0
  %1565 = vmatprep.subr.mxu0 0.0
  %1566 = vmatpush1.msra.mxu0 0.0
  %1567 = vmatprep.subr.mxu0 0.0
  %1568 = vmatpush1.msra.mxu0 0.0
  %1569 = vmatprep.subr.mxu0 0.0
  %1570 = vmatpush1.msra.mxu0 0.0
  %1571 = vmatprep.subr.mxu0 0.0
  %1572 = vmatpush1.msra.mxu0 0.0
  %1573 = vmatprep.subr.mxu0 0.0
  %1574 = vmatpush1.msra.mxu0 0.0
  %1575 = vmatprep.subr.mxu0 0.0
  %1576 = vmatpush1.msra.mxu0 0.0
  %1577 = vmatprep.subr.mxu0 0.0
  %1578 = vmatpush1.msra.mxu0 0.0
  %1579 = vmatprep.subr.mxu0 0.0
  %1580 = vmatpush1.msra.mxu0 0.0
  %1581 = vmatprep.subr.mxu0 0.0
  %1582 = vmatpush1.msra.mxu0 0.0
  %1583 = vmatprep.subr.mxu0 0.0
  %1584 = vmatpush1.msra.mxu0 0.0
  %1585 = vmatprep.subr.mxu0 0.0
  %1586 = vmatpush1.msra.mxu0 0.0
  %1587 = vmatprep.subr.mxu0 0.0
  %1588 = vmatpush1.msra.mxu0 0.0
  %1589 = vmatprep.subr.mxu0 0.0
  %1590 = vmatpush1.msra.mxu0 0.0
  %1591 = vmatprep.subr.mxu0 0.0
  %1592 = vmatpush1.msra.mxu0 0.0
  %1593 = vmatprep.subr.mxu0 %v1561
  %1594 = vmatpush1.msra.mxu0 %v1558
  %1595 = vmatprep.subr.mxu0 0.0
  %1596 = vmatpush2.msra.mxu0 0.0
  %1597 = vmatprep.subr.mxu0 0.0
  %1598 = vmatpush2.msra.mxu0 0.0
  %1599 = vmatprep.subr.mxu0 0.0
  %1600 = vmatpush2.msra.mxu0 0.0
  %1601 = vmatprep.subr.mxu0 0.0
  %1602 = vmatpush2.msra.mxu0 0.0
  %1603 = vmatprep.subr.mxu0 0.0
  %1604 = vmatpush2.msra.mxu0 0.0
  %1605 = vmatprep.subr.mxu0 0.0
  %1606 = vmatpush2.msra.mxu0 0.0
  %1607 = vmatprep.subr.mxu0 0.0
  %1608 = vmatpush2.msra.mxu0 0.0
  %1609 = vmatprep.subr.mxu0 0.0
  %1610 = vmatpush2.msra.mxu0 0.0
  %1611 = vmatprep.subr.mxu0 0.0
  %1612 = vmatpush2.msra.mxu0 0.0
  %1613 = vmatprep.subr.mxu0 0.0
  %1614 = vmatpush2.msra.mxu0 0.0
  %1615 = vmatprep.subr.mxu0 0.0
  %1616 = vmatpush2.msra.mxu0 0.0
  %1617 = vmatprep.subr.mxu0 0.0
  %1618 = vmatpush2.msra.mxu0 0.0
  %1619 = vmatprep.subr.mxu0 0.0
  %1620 = vmatpush2.msra.mxu0 0.0
  %1621 = vmatprep.subr.mxu0 0.0
  %1622 = vmatpush2.msra.mxu0 0.0
  %1623 = vmatprep.subr.mxu0 0.0
  %1624 = vmatpush2.msra.mxu0 0.0
  %1625 = vmatprep.subr.mxu0 0.0
  %1626 = vmatpush2.msra.mxu0 0.0
  %1627 = vmatprep.mubr.f32.mxu0 0.0
  %1628 = vmatmul.mubr.f32.gmra.mxu0 %v1555
  %v1629 = vpop.f32.mrf.mxu0
  %v1630 = vadd.f32 0.0, %v1629
  %v1631 = vpop.f32.mrf.mxu0
  %v1632 = vadd.f32 0.0, %v1631
  %1633 = vdwg.mxu0
  %v1634 = vadd.f32 %v1545, %v1630
  %v1635 = vadd.f32 %v1546, %v1632
  %v1636 = vadd.f32 %v1634, %v831
  %v1637 = vadd.f32 %v1635, %v831
  %v1640 = vcombine.low %v1636, %v1637
  %v1641 = vrot.slane %v1640, 6
  %1643 = vst [vmem:[%s3] sm:$0xcc] %v1641
  // Predicated region
  $region14: #{conv2d_pallas.1} parent=0 // pred_check
    _
  $region15: #{conv2d_pallas.1} parent=0 // pred_check_branch
    %1645 = sbr.rel (0) target = $region17
  $region16: #{conv2d_pallas.1} parent=0 // pred_region
    _
  $region17: #{conv2d_pallas.1} parent=0 // pred_fallthru
    _
  // Predicated region
  $region18: #{conv2d_pallas.1} parent=0 // pred_check
    _
  $region19: #{conv2d_pallas.1} parent=0 // pred_check_branch
    %1647 = sbr.rel (0) target = $region21
  $region20: #{conv2d_pallas.1} parent=0 // pred_region
    _
  $region21: #{conv2d_pallas.1} parent=0 // pred_fallthru
    _

</llo_original>
